<compile_context>
chip_gen: v6e
topology: v6e:2x2x1
jax: 0.10.0
libtpu: 0.0.40
codegen_flags: <defaults>
</compile_context>

<pallas_src>
import functools

import jax
import jax.numpy as jnp
import numpy as np
from jax import lax
from jax.experimental import pallas as pl
from jax.experimental.pallas import tpu as pltpu


# ----------------------------- helpers --------------------------------------

def _cdiv(a: int, b: int) -> int:
    return -(-a // b)


def _round_up(x: int, m: int) -> int:
    return _cdiv(x, m) * m


def _round8_down(x: int) -> int:
    return max(8, (x // 8) * 8)


@functools.lru_cache(maxsize=None)
def _vmem_budget_limit():
    """Generation-aware (working-set budget, scoped VMEM limit) in bytes."""
    try:
        cap = int(pltpu.get_tpu_info().vmem_capacity_bytes)
    except Exception:                     # no TPU info available -> be conservative
        cap = 64 * 1024 * 1024            # v7x-sized physical VMEM
    budget = min(cap // 4, 32 * 1024 * 1024)        # per-kernel working-set target
    limit = min((cap * 3) // 4, 96 * 1024 * 1024)   # scoped VMEM ceiling
    return budget, limit


def _fits_onehot(vocab: int, dim: int, itemsize: int) -> bool:
    """Table small enough to live in VMEM and be gathered via one-hot matmul."""
    budget, _ = _vmem_budget_limit()
    return (vocab * dim * itemsize <= min(budget // 4, 8 * 1024 * 1024)
            and vocab <= 8192)


def _apply_non_linearity(x, non_linearity: str):
    if non_linearity == "tanh":
        return jnp.tanh(x)
    if non_linearity == "sigmoid":
        return jax.nn.sigmoid(x)
    if non_linearity == "relu":
        return jnp.maximum(x, 0.0)
    return x


# ------------------------ pass 1: vocab merge kernel -------------------------

def _make_merge_kernel(num_models: int):
    """out[v, d] = sum_m w[m, d] * emb_m[v, d] on a (TV, D) vocab tile."""

    def kernel(w_ref, *refs):
        emb_refs = refs[:num_models]           # each (TV, D)
        out_ref = refs[num_models]             # (TV, D)
        w = w_ref[...]                         # (M, D) f32, non-linearity applied
        acc = w[0][None, :] * emb_refs[0][...].astype(jnp.float32)
        for m in range(1, num_models):
            acc = acc + w[m][None, :] * emb_refs[m][...].astype(jnp.float32)
        out_ref[...] = acc.astype(out_ref.dtype)

    return kernel


def _merge_tables(w_mat, embeddings):
    num_models = len(embeddings)
    V, D = embeddings[0].shape
    dtype = embeddings[0].dtype
    itemsize = jnp.dtype(dtype).itemsize
    budget, limit = _vmem_budget_limit()
    # Pure HBM-roofline pass: size (tv, D) blocks by bytes only, counting
    # double-buffered inputs (M tables) + double-buffered output + the w block.
    per_row = (2 * num_models + 2) * D * itemsize
    tv = _round8_down(max(1, budget // per_row))
    tv = min(tv, V) if V >= 8 else V           # full-dim block always legal

    return pl.pallas_call(
        _make_merge_kernel(num_models),
        out_shape=jax.ShapeDtypeStruct((V, D), dtype),
        grid=(_cdiv(V, tv),),
        in_specs=[pl.BlockSpec((num_models, D), lambda i: (0, 0))]
                 + [pl.BlockSpec((tv, D), lambda i: (i, 0))
                    for _ in range(num_models)],
        out_specs=pl.BlockSpec((tv, D), lambda i: (i, 0)),
        compiler_params=pltpu.CompilerParams(
            dimension_semantics=("parallel",),
            vmem_limit_bytes=limit),
    )(w_mat, *embeddings)


# ---------------- pass 2a: one-hot MXU gather (table fits VMEM) --------------

def _make_onehot_gather_kernel(vocab: int):
    """out[t, :] = table[ids[t], :] via a (TQ, V) one-hot matmul on the MXU."""

    def kernel(ids_ref, table_ref, out_ref):
        ids = ids_ref[...]                                          # (tq, 1) i32
        cols = lax.broadcasted_iota(jnp.int32, (ids.shape[0], vocab), 1)
        one_hot = (cols == ids).astype(table_ref.dtype)             # exact select
        out_ref[...] = jnp.dot(one_hot, table_ref[...],
                               preferred_element_type=jnp.float32
                               ).astype(out_ref.dtype)

    return kernel


def _gather_rows_onehot(table, ids_flat):
    V, D = table.shape
    T = ids_flat.shape[0]
    dtype = table.dtype
    itemsize = jnp.dtype(dtype).itemsize
    budget, limit = _vmem_budget_limit()
    # >= 2 tiles so both v7x TensorCores get work even for decode-sized T.
    tq_cap = max(8, _round_up(_cdiv(T, 2), 8))
    avail = max(8 * D * itemsize, budget - 2 * V * D * itemsize)
    per_row = 2 * D * itemsize + 4 * V + 4     # out (x2) + one-hot tmp + ids
    tq = max(8, min(256, tq_cap, _round8_down(avail // per_row)))
    n_tiles = _cdiv(T, tq)
    T_pad = n_tiles * tq
    ids = ids_flat if T_pad == T else jnp.pad(ids_flat, (0, T_pad - T))
    ids2d = ids.reshape(T_pad, 1)

    return pl.pallas_call(
        _make_onehot_gather_kernel(V),
        out_shape=jax.ShapeDtypeStruct((T, D), dtype),
        grid=(n_tiles,),
        in_specs=[pl.BlockSpec((tq, 1), lambda i: (i, 0)),
                  pl.BlockSpec((V, D), lambda i: (0, 0))],   # resident table
        out_specs=pl.BlockSpec((tq, D), lambda i: (i, 0)),
        compiler_params=pltpu.CompilerParams(
            dimension_semantics=("parallel",),
            vmem_limit_bytes=limit),
    )(ids2d, table)


# ---------------- pass 2b: DMA row gather (large table, any T) ---------------

def _make_dma_gather_kernel(tq: int):
    """Gather tq rows of `table` (HBM) directly into the output block."""
    assert tq % 8 == 0

    def kernel(ids_ref, table_hbm, out_ref, sem):
        base = pl.program_id(0) * tq

        # 8-wide unrolled issue: one (1, D) row DMA per token, landing directly
        # in the pipelined output block (no intermediate scratch copy).
        @pl.loop(0, tq // 8)
        def _issue(j):
            t0 = pl.multiple_of(j * 8, 8)
            for u in range(8):
                t = t0 + u
                rid = ids_ref[base + t]
                pltpu.make_async_copy(table_hbm.at[pl.ds(rid, 1)],
                                      out_ref.at[pl.ds(t, 1)],
                                      sem.at[0]).start()

        # ONE aggregated wait: descriptor bytes (tq*D*itemsize) equal the sum of
        # the tq issued (1, D) row copies, so semaphore byte-accounting balances.
        # src == dst == out_ref keeps the descriptor in-bounds for any V.
        pltpu.make_async_copy(out_ref, out_ref, sem.at[0]).wait()
        # TODO(synk): double-buffer across grid steps (issue tile i+1's rows
        # before draining tile i) to hide row-gather latency on tiny grids.

    return kernel


def _gather_rows_dma(table, ids_flat):
    V, D = table.shape
    T = ids_flat.shape[0]
    dtype = table.dtype
    itemsize = jnp.dtype(dtype).itemsize
    budget, limit = _vmem_budget_limit()
    tq_cap = max(8, _round_up(_cdiv(T, 2), 8))
    # 256-row cap also bounds outstanding DMAs per aggregated wait.
    tq = max(8, min(256, tq_cap, _round8_down(budget // (2 * D * itemsize))))
    n_tiles = _cdiv(T, tq)
    T_pad = n_tiles * tq
    ids = ids_flat if T_pad == T else jnp.pad(ids_flat, (0, T_pad - T))
    # TODO(synk): for very large T (hundreds of thousands of tokens), chunk ids
    # over multiple pallas_calls to bound the scalar-prefetch SMEM footprint.

    return pl.pallas_call(
        _make_dma_gather_kernel(tq),
        out_shape=jax.ShapeDtypeStruct((T, D), dtype),
        grid_spec=pltpu.PrefetchScalarGridSpec(
            num_scalar_prefetch=1,
            grid=(n_tiles,),
            in_specs=[pl.BlockSpec(memory_space=pl.ANY)],
            out_specs=pl.BlockSpec((tq, D), lambda i, ids: (i, 0)),
            scratch_shapes=[pltpu.SemaphoreType.DMA((1,))]),
        compiler_params=pltpu.CompilerParams(
            dimension_semantics=("parallel",),
            vmem_limit_bytes=limit),
    )(ids, table)


def _gather_rows(table, ids_flat):
    V, D = table.shape
    if _fits_onehot(V, D, jnp.dtype(table.dtype).itemsize):
        return _gather_rows_onehot(table, ids_flat)
    return _gather_rows_dma(table, ids_flat)


# --------------- fused gather + merge (large V, T small vs V) ----------------

def _make_fused_kernel(num_models: int, tq: int):
    """Per TQ-token tile: gather one row from each of M HBM tables, weighted sum."""
    assert tq % 8 == 0

    def kernel(ids_ref, w_ref, *refs):
        tables = refs[:num_models]             # HBM refs, each (V, D)
        out_ref = refs[num_models]             # (tq, D)
        vbuf = refs[num_models + 1]            # (M, tq, D) VMEM scratch
        sem = refs[num_models + 2]             # one DMA sem per model
        base = pl.program_id(0) * tq

        @pl.loop(0, tq // 8)
        def _issue(j):
            t0 = pl.multiple_of(j * 8, 8)
            for u in range(8):
                t = t0 + u
                rid = ids_ref[base + t]
                for m in range(num_models):
                    pltpu.make_async_copy(tables[m].at[pl.ds(rid, 1)],
                                          vbuf.at[m, pl.ds(t, 1)],
                                          sem.at[m]).start()

        # One aggregated wait per model: (tq, D) bytes each matches the tq
        # issued (1, D) row copies signaled on that model's semaphore.
        for m in range(num_models):
            pltpu.make_async_copy(vbuf.at[m], vbuf.at[m], sem.at[m]).wait()

        w = w_ref[...]                          # (M, D) f32, non-lin pre-applied
        acc = w[0][None, :] * vbuf[0].astype(jnp.float32)
        for m in range(1, num_models):
            acc = acc + w[m][None, :] * vbuf[m].astype(jnp.float32)
        out_ref[...] = acc.astype(out_ref.dtype)

    return kernel


def _fused_gather_merge(w_mat, embeddings, ids_flat):
    num_models = len(embeddings)
    V, D = embeddings[0].shape
    dtype = embeddings[0].dtype
    itemsize = jnp.dtype(dtype).itemsize
    T = ids_flat.shape[0]
    budget, limit = _vmem_budget_limit()
    tq_cap = max(8, _round_up(_cdiv(T, 2), 8))
    per_row = (num_models + 2) * D * itemsize   # vbuf + double-buffered out
    # 128-row cap bounds outstanding DMAs at 128*num_models per tile.
    tq = max(8, min(128, tq_cap, _round8_down(budget // per_row)))
    n_tiles = _cdiv(T, tq)
    T_pad = n_tiles * tq
    ids = ids_flat if T_pad == T else jnp.pad(ids_flat, (0, T_pad - T))
    # TODO(synk): if the M tables were pre-stacked to (V, M*D) at init time, one
    # M*D-byte DMA per token would replace M D-byte DMAs; per-call stacking in
    # the wrapper costs more HBM traffic than the merge pass, so it is skipped.

    return pl.pallas_call(
        _make_fused_kernel(num_models, tq),
        out_shape=jax.ShapeDtypeStruct((T, D), dtype),
        grid_spec=pltpu.PrefetchScalarGridSpec(
            num_scalar_prefetch=1,
            grid=(n_tiles,),
            in_specs=[pl.BlockSpec((num_models, D), lambda i, ids: (0, 0))]
                     + [pl.BlockSpec(memory_space=pl.ANY)
                        for _ in range(num_models)],
            out_specs=pl.BlockSpec((tq, D), lambda i, ids: (i, 0)),
            scratch_shapes=[pltpu.VMEM((num_models, tq, D), dtype),
                            pltpu.SemaphoreType.DMA((num_models,))]),
        compiler_params=pltpu.CompilerParams(
            dimension_semantics=("parallel",),
            vmem_limit_bytes=limit),
    )(ids, w_mat, *embeddings)


# ------------------------------ public forward -------------------------------

@functools.partial(jax.jit, static_argnames=("non_linearity", "model_index"))
def dam_embedding_forward(input_ids, embeddings, mergers,
                          non_linearity: str = "tanh",
                          model_index=None):
    """JAX/Pallas equivalent of DAMEmbeddingLayer.forward.

    input_ids:  (B, S) int
    embeddings: tuple of M arrays, each (V, D)
    mergers:    tuple of M arrays, each (D,)
    returns:    (B, S, D)
    """
    embeddings = tuple(embeddings)
    num_models = len(embeddings)
    V, D = embeddings[0].shape
    ids_flat = input_ids.reshape(-1).astype(jnp.int32)
    T = ids_flat.shape[0]
    itemsize = jnp.dtype(embeddings[0].dtype).itemsize

    if model_index is not None:
        # F.embedding(input_ids, embeddings[model_index]): dedicated gather.
        out = _gather_rows(embeddings[model_index], ids_flat)
    else:
        # Hoisted: non-linearity on mergers computed once, outside the kernels.
        w_mat = _apply_non_linearity(
            jnp.stack(tuple(mergers), axis=0).astype(jnp.float32), non_linearity)
        two_pass = (_fits_onehot(V, D, itemsize)
                    or (num_models - 1) * T >= num_models * V)
        if two_pass:
            # Merge the whole table once (HBM-roofline pass), then gather.
            merged = _merge_tables(w_mat, embeddings)
            out = _gather_rows(merged, ids_flat)
        else:
            # Big vocab, few tokens (decode-like): per-token gather + merge.
            out = _fused_gather_merge(w_mat, embeddings, ids_flat)

    return out.reshape(input_ids.shape + (D,))


# ------------------------------- reference -----------------------------------

def _reference_forward(input_ids, embeddings, mergers, non_linearity="tanh",
                       model_index=None):
    if model_index is not None:
        return jnp.take(embeddings[model_index], input_ids, axis=0)
    ws = [_apply_non_linearity(m.astype(jnp.float32), non_linearity)
          for m in mergers]
    table = sum(w[None, :] * e.astype(jnp.float32)
                for w, e in zip(ws, embeddings))
    return jnp.take(table.astype(embeddings[0].dtype), input_ids, axis=0)


# --------------------------------- test --------------------------------------

if __name__ == "__main__":
    num_models = 3
    D = 256

    def make_params(V, kp):
        ks = jax.random.split(kp, num_models)
        embeddings = tuple(
            jax.random.normal(k, (V, D), dtype=jnp.float32) for k in ks)
        mergers = tuple(
            jnp.full((D,), 1.0 / num_models, dtype=jnp.float32) * (1.0 + 0.1 * i)
            for i in range(num_models))
        return embeddings, mergers

    key = jax.random.PRNGKey(0)
    k1, k2, k3, k4, k5, k6 = jax.random.split(key, 6)

    # Case 1: small vocab, few tokens -> merge pass + one-hot MXU gather.
    V1, B1, S1 = 512, 2, 8
    emb1, mrg1 = make_params(V1, k1)
    ids1 = jax.random.randint(k2, (B1, S1), 0, V1, dtype=jnp.int32)
    out1 = jax.block_until_ready(dam_embedding_forward(ids1, emb1, mrg1))
    np.testing.assert_allclose(np.asarray(out1),
                               np.asarray(_reference_forward(ids1, emb1, mrg1)),
                               rtol=1e-5, atol=1e-5)

    # Case 2: tiny vocab, many tokens -> same two-pass path, multi-tile gather.
    V2, B2, S2 = 64, 4, 64
    emb2, mrg2 = make_params(V2, k3)
    ids2 = jax.random.randint(k4, (B2, S2), 0, V2, dtype=jnp.int32)
    out2 = jax.block_until_ready(dam_embedding_forward(ids2, emb2, mrg2))
    np.testing.assert_allclose(np.asarray(out2),
                               np.asarray(_reference_forward(ids2, emb2, mrg2)),
                               rtol=1e-5, atol=1e-5)

    # Case 3: model_index on the small vocab -> one-hot gather only.
    out3 = jax.block_until_ready(
        dam_embedding_forward(ids1, emb1, mrg1, model_index=1))
    np.testing.assert_allclose(
        np.asarray(out3),
        np.asarray(_reference_forward(ids1, emb1, mrg1, model_index=1)),
        rtol=1e-5, atol=1e-5)

    # Case 4: large vocab (table above the one-hot/VMEM threshold), few tokens
    # -> fused per-token DMA gather + merge kernel.
    V4, B4, S4 = 9216, 2, 8
    emb4, mrg4 = make_params(V4, k5)
    ids4 = jax.random.randint(k6, (B4, S4), 0, V4, dtype=jnp.int32)
    out4 = jax.block_until_ready(dam_embedding_forward(ids4, emb4, mrg4))
    np.testing.assert_allclose(np.asarray(out4),
                               np.asarray(_reference_forward(ids4, emb4, mrg4)),
                               rtol=1e-5, atol=1e-5)

    # Case 5: model_index on the large vocab -> DMA row-gather kernel.
    out5 = jax.block_until_ready(
        dam_embedding_forward(ids4, emb4, mrg4, model_index=0))
    np.testing.assert_allclose(
        np.asarray(out5),
        np.asarray(_reference_forward(ids4, emb4, mrg4, model_index=0)),
        rtol=1e-5, atol=1e-5)

    print("KERNEL_OK")
</pallas_src>

<mosaic_0001>
module attributes {stable_mosaic.version = 11 : i64} {
  func.func @kernel(%arg0: i32, %arg1: memref<8x1xi32, #tpu.memory_space<vmem>>, %arg2: memref<512x256xf32, #tpu.memory_space<vmem>>, %arg3: memref<8x256xf32, #tpu.memory_space<vmem>>) attributes {dimension_semantics = [#tpu.dimension_semantics<parallel>], iteration_bounds = array<i64: 2>, scalar_prefetch = 0 : i64, scratch_operands = 0 : i64, tpu.core_type = #tpu.core_type<tc>, window_params = [{transform_indices = @transform_0, window_bounds = array<i64: 8, 1>}, {pipeline_mode = #tpu.pipeline_mode<synchronous>, transform_indices = @transform_1, window_bounds = array<i64: 512, 256>}, {transform_indices = @transform_2, window_bounds = array<i64: 8, 256>}]} {
    %c0 = arith.constant 0 : index
    %c0_0 = arith.constant 0 : index
    %0 = vector.load %arg1[%c0, %c0_0] : memref<8x1xi32, #tpu.memory_space<vmem>>, vector<8x1xi32>
    %1 = tpu.iota {dimensions = array<i32: 1>} : vector<8x512xi32>
    %2 = vector.broadcast %0 : vector<8x1xi32> to vector<8x512xi32>
    %3 = arith.cmpi eq, %1, %2 : vector<8x512xi32>
    %4 = arith.extui %3 : vector<8x512xi1> to vector<8x512xi32>
    %5 = arith.sitofp %4 : vector<8x512xi32> to vector<8x512xf32>
    %c0_1 = arith.constant 0 : index
    %c0_2 = arith.constant 0 : index
    %6 = vector.load %arg2[%c0_1, %c0_2] : memref<512x256xf32, #tpu.memory_space<vmem>>, vector<512x256xf32>
    %cst = arith.constant dense<0.000000e+00> : vector<8x256xf32>
    %7 = tpu.matmul %5, %6, %cst {dimension_numbers = #tpu.dot_dimension_numbers<[1], [0], [0], [1], [0, 0, 1, 1], [], []>} : vector<8x512xf32>, vector<512x256xf32>, vector<8x256xf32> -> vector<8x256xf32>
    %c0_3 = arith.constant 0 : index
    %c0_4 = arith.constant 0 : index
    %8 = vector.load %arg3[%c0_3, %c0_4] : memref<8x256xf32, #tpu.memory_space<vmem>>, vector<8x256xf32>
    tpu.vector_store %arg3[%c0_3, %c0_4], %7 {strides = array<i32>} : memref<8x256xf32, #tpu.memory_space<vmem>>, vector<8x256xf32>,
    return
  }
  func.func @transform_0(%arg0: i32) -> (i32, i32) {
    %c0_i32 = arith.constant 0 : i32
    %c0_i32_0 = arith.constant 0 : i32
    return %arg0, %c0_i32 : i32, i32
  }
  func.func @transform_1(%arg0: i32) -> (i32, i32) {
    %c0_i32 = arith.constant 0 : i32
    %c0_i32_0 = arith.constant 0 : i32
    %c0_i32_1 = arith.constant 0 : i32
    return %c0_i32, %c0_i32_0 : i32, i32
  }
  func.func @transform_2(%arg0: i32) -> (i32, i32) {
    %c0_i32 = arith.constant 0 : i32
    %c0_i32_0 = arith.constant 0 : i32
    return %arg0, %c0_i32 : i32, i32
  }
}

module attributes {stable_mosaic.version = 11 : i64} {
  func.func @kernel(%arg0: i32, %arg1: memref<3x256xf32, #tpu.memory_space<vmem>>, %arg2: memref<512x256xf32, #tpu.memory_space<vmem>>, %arg3: memref<512x256xf32, #tpu.memory_space<vmem>>, %arg4: memref<512x256xf32, #tpu.memory_space<vmem>>, %arg5: memref<512x256xf32, #tpu.memory_space<vmem>>) attributes {dimension_semantics = [#tpu.dimension_semantics<parallel>], iteration_bounds = array<i64: 1>, scalar_prefetch = 0 : i64, scratch_operands = 0 : i64, tpu.core_type = #tpu.core_type<tc>, window_params = [{pipeline_mode = #tpu.pipeline_mode<synchronous>, transform_indices = @transform_0, window_bounds = array<i64: 3, 256>}, {transform_indices = @transform_1, window_bounds = array<i64: 512, 256>}, {transform_indices = @transform_2, window_bounds = array<i64: 512, 256>}, {transform_indices = @transform_3, window_bounds = array<i64: 512, 256>}, {transform_indices = @transform_4, window_bounds = array<i64: 512, 256>}]} {
    %c0 = arith.constant 0 : index
    %c0_0 = arith.constant 0 : index
    %0 = vector.load %arg1[%c0, %c0_0] : memref<3x256xf32, #tpu.memory_space<vmem>>, vector<3x256xf32>
    %1 = vector.extract_strided_slice %0 {offsets = [0, 0], sizes = [1, 256], strides = [1, 1]} : vector<3x256xf32> to vector<1x256xf32>
    %2 = vector.shape_cast %1 : vector<1x256xf32> to vector<256xf32>
    %3 = vector.shape_cast %2 : vector<256xf32> to vector<1x256xf32>
    %c0_1 = arith.constant 0 : index
    %c0_2 = arith.constant 0 : index
    %4 = vector.load %arg2[%c0_1, %c0_2] : memref<512x256xf32, #tpu.memory_space<vmem>>, vector<512x256xf32>
    %5 = vector.broadcast %3 : vector<1x256xf32> to vector<512x256xf32>
    %6 = arith.mulf %5, %4 : vector<512x256xf32>
    %7 = vector.extract_strided_slice %0 {offsets = [1, 0], sizes = [1, 256], strides = [1, 1]} : vector<3x256xf32> to vector<1x256xf32>
    %8 = vector.shape_cast %7 : vector<1x256xf32> to vector<256xf32>
    %9 = vector.shape_cast %8 : vector<256xf32> to vector<1x256xf32>
    %c0_3 = arith.constant 0 : index
    %c0_4 = arith.constant 0 : index
    %10 = vector.load %arg3[%c0_3, %c0_4] : memref<512x256xf32, #tpu.memory_space<vmem>>, vector<512x256xf32>
    %11 = vector.broadcast %9 : vector<1x256xf32> to vector<512x256xf32>
    %12 = arith.mulf %11, %10 : vector<512x256xf32>
    %13 = arith.addf %6, %12 : vector<512x256xf32>
    %14 = vector.extract_strided_slice %0 {offsets = [2, 0], sizes = [1, 256], strides = [1, 1]} : vector<3x256xf32> to vector<1x256xf32>
    %15 = vector.shape_cast %14 : vector<1x256xf32> to vector<256xf32>
    %16 = vector.shape_cast %15 : vector<256xf32> to vector<1x256xf32>
    %c0_5 = arith.constant 0 : index
    %c0_6 = arith.constant 0 : index
    %17 = vector.load %arg4[%c0_5, %c0_6] : memref<512x256xf32, #tpu.memory_space<vmem>>, vector<512x256xf32>
    %18 = vector.broadcast %16 : vector<1x256xf32> to vector<512x256xf32>
    %19 = arith.mulf %18, %17 : vector<512x256xf32>
    %20 = arith.addf %13, %19 : vector<512x256xf32>
    %c0_7 = arith.constant 0 : index
    %c0_8 = arith.constant 0 : index
    %21 = vector.load %arg5[%c0_7, %c0_8] : memref<512x256xf32, #tpu.memory_space<vmem>>, vector<512x256xf32>
    tpu.vector_store %arg5[%c0_7, %c0_8], %20 {strides = array<i32>} : memref<512x256xf32, #tpu.memory_space<vmem>>, vector<512x256xf32>,
    return
  }
  func.func @transform_0(%arg0: i32) -> (i32, i32) {
    %c0_i32 = arith.constant 0 : i32
    %c0_i32_0 = arith.constant 0 : i32
    %c0_i32_1 = arith.constant 0 : i32
    return %c0_i32, %c0_i32_0 : i32, i32
  }
  func.func @transform_1(%arg0: i32) -> (i32, i32) {
    %c0_i32 = arith.constant 0 : i32
    %c0_i32_0 = arith.constant 0 : i32
    return %arg0, %c0_i32 : i32, i32
  }
  func.func @transform_2(%arg0: i32) -> (i32, i32) {
    %c0_i32 = arith.constant 0 : i32
    %c0_i32_0 = arith.constant 0 : i32
    return %arg0, %c0_i32 : i32, i32
  }
  func.func @transform_3(%arg0: i32) -> (i32, i32) {
    %c0_i32 = arith.constant 0 : i32
    %c0_i32_0 = arith.constant 0 : i32
    return %arg0, %c0_i32 : i32, i32
  }
  func.func @transform_4(%arg0: i32) -> (i32, i32) {
    %c0_i32 = arith.constant 0 : i32
    %c0_i32_0 = arith.constant 0 : i32
    return %arg0, %c0_i32 : i32, i32
  }
}

</mosaic_0001>

<llo_original>
// kernel: dam_embedding_forward.3
$region0: #{dam_embedding_forward.3}
  #allocation0 [shape = 'u32[]', space=smem, size = 0x4, offset = 0x4, fixed_abs, tag = 'smem constant byte address 0x4 - core index']
  #allocation1 [shape = 'u32[144,128]{1,0:T(1,128)}', space=vmem, size = 0x12000, scoped, tag = 'internal scratch']
  %s0 = inlined_call_operand.vmem [shape: s32[16,1], index: 0, kind: input, shape index: {}]
  %s1 = inlined_call_operand.vmem [shape: f32[512,256], index: 1, kind: input, shape index: {}]
  %s2 = inlined_call_operand.hbm [shape: f32[16,256], index: 2, kind: output, shape index: {}]
  %s3 = sld [smem:[#allocation0]]
  $region41: #{dam_embedding_forward.3} parent=0
    _
  %s5 = ssub.s32 1, %s3
  %s6 = scalar_select 0, %s5, %s3
  $region1: #{dam_embedding_forward.3} parent=0
    #allocation2 [shape = 'u8[16384]{0}', space=vmem, size = 0x4000, scoped, tag = 'output window, operand 0']
    #allocation3 [shape = 's32[2]{0}', space=sflag, size = 0x8, scoped, tag = 'scoped memory for dam_embedding_forward.3']
    %7 = vsyncpa [#allocation3], 0
    %s8 = scalar_lea.sflag [#allocation3], 1
    %9 = vsyncpa %s8, 0
    loop: start=0, step=1, limit=4
    $region2: #{dam_embedding_forward.3} parent=1 // loop_pre_header
      _
    $region3: #{dam_embedding_forward.3} parent=1 // loop_header
      %s11 = sphi 0, %s15
      %p12 = scmp.ge.s32.totalorder %s11, 4
      %s21 = sphi 0, %s23
      %s24 = sphi 0, %s21
      %s25 = sphi 0, %s24
      %s41 = sphi 0, %s25
      %s45 = sphi 0, %s45
      %s47 = sphi 0, %s45
      %s48 = sphi 0, %s47
      %s62 = sphi 0, %s48
      %s68 = sphi 0, %s70
      %s71 = sphi 0, %s68
      %s72 = sphi 0, %s71
      %s88 = sphi 0, %s72
    $region4: #{dam_embedding_forward.3} parent=1 // loop_header_branch
      %14 = sbr.rel (%p12) target = $region8
    $region5: #{dam_embedding_forward.3} parent=1 // loop_body
      %s16 = ssub.s32 %s11, 1
      %s17 = ssub.s32 %s11, 2
      %s18 = sadd.s32 %s11, 1
      %s19 = ssub.s32 %s11, %s18
      %p20 = scmp.eq.s32.totalorder %s19, 0
      %s22 = sadd.s32 %s21, 1
      %s23 = scalar_select %p20, %s21, %s22
      %p26 = pneg %p20
      %p27 = scmp.eq.s32.totalorder %s11, 1
      %p28 = por %p26, %p27
      %p29 = scmp.ne.s32.totalorder %s21, %s24
      %p30 = scmp.eq.s32.totalorder %s11, 0
      %p31 = por %p29, %p30
      %p32 = scmp.ne.s32.totalorder %s21, %s24
      %p33 = scmp.eq.s32.totalorder %s16, 1
      %p34 = por %p32, %p33
      %p35 = scmp.ne.s32.totalorder %s24, %s25
      %p36 = scmp.eq.s32.totalorder %s16, 0
      %p37 = por %p35, %p36
      %p38 = scmp.ne.s32.totalorder %s24, %s25
      %p39 = scmp.eq.s32.totalorder %s17, 1
      %p40 = por %p38, %p39
      %p42 = scmp.ne.s32.totalorder %s25, %s41
      %p43 = scmp.eq.s32.totalorder %s17, 0
      %p44 = por %p42, %p43
      %s46 = sadd.s32 %s45, 1
      %p49 = scmp.eq.s32.totalorder %s11, 1
      %p50 = scmp.ne.s32.totalorder %s45, %s47
      %p51 = scmp.eq.s32.totalorder %s11, 0
      %p52 = por %p50, %p51
      %p53 = scmp.ne.s32.totalorder %s45, %s47
      %p54 = scmp.eq.s32.totalorder %s16, 1
      %p55 = por %p53, %p54
      %p56 = scmp.ne.s32.totalorder %s47, %s48
      %p57 = scmp.eq.s32.totalorder %s16, 0
      %p58 = por %p56, %p57
      %p59 = scmp.ne.s32.totalorder %s47, %s48
      %p60 = scmp.eq.s32.totalorder %s17, 1
      %p61 = por %p59, %p60
      %p63 = scmp.ne.s32.totalorder %s48, %s62
      %p64 = scmp.eq.s32.totalorder %s17, 0
      %p65 = por %p63, %p64
      %s66 = ssub.s32 %s11, %s18
      %p67 = scmp.eq.s32.totalorder %s66, 0
      %s69 = sadd.s32 %s68, 1
      %s70 = scalar_select %p67, %s68, %s69
      %p73 = pneg %p67
      %p74 = scmp.eq.s32.totalorder %s11, 1
      %p75 = por %p73, %p74
      %p76 = scmp.ne.s32.totalorder %s68, %s71
      %p77 = scmp.eq.s32.totalorder %s11, 0
      %p78 = por %p76, %p77
      %p79 = scmp.ne.s32.totalorder %s68, %s71
      %p80 = scmp.eq.s32.totalorder %s16, 1
      %p81 = por %p79, %p80
      %p82 = scmp.ne.s32.totalorder %s71, %s72
      %p83 = scmp.eq.s32.totalorder %s16, 0
      %p84 = por %p82, %p83
      %p85 = scmp.ne.s32.totalorder %s71, %s72
      %p86 = scmp.eq.s32.totalorder %s17, 1
      %p87 = por %p85, %p86
      %p89 = scmp.ne.s32.totalorder %s72, %s88
      %p90 = scmp.eq.s32.totalorder %s17, 0
      %p91 = por %p89, %p90
      %p92 = scmp.le.s32.totalorder 1, %s11
      %p93 = scmp.lt.s32.totalorder %s11, 3
      %p94 = pnand %p92, %p93
      %p95 = pneg %p94
      // Predicated region
      $region9: #{dam_embedding_forward.3} parent=5 // pred_check
        _
      $region10: #{dam_embedding_forward.3} parent=5 // pred_check_branch
        %97 = sbr.rel (%p94) target = $region12
      $region11: #{dam_embedding_forward.3} parent=5 // pred_region
        %s98 = ssub.s32 %s11, 1
        // Predicated region
        $region13: #{dam_embedding_forward.3} parent=11 // pred_check
          %p99 = pneg %p58
        $region14: #{dam_embedding_forward.3} parent=11 // pred_check_branch
          %101 = sbr.rel (%p99) target = $region16
        $region15: #{dam_embedding_forward.3} parent=11 // pred_region
          _
        $region16: #{dam_embedding_forward.3} parent=11 // pred_fallthru
          _
      $region12: #{dam_embedding_forward.3} parent=5 // pred_fallthru
        _
      %p102 = scmp.lt.s32.totalorder %s11, 2
      // Predicated region
      $region17: #{dam_embedding_forward.3} parent=5 // pred_check
        %p103 = pneg %p102
      $region18: #{dam_embedding_forward.3} parent=5 // pred_check_branch
        %105 = sbr.rel (%p103) target = $region20
      $region19: #{dam_embedding_forward.3} parent=5 // pred_region
        // Predicated region
        $region21: #{dam_embedding_forward.3} parent=19 // pred_check
          %p106 = pneg %p31
        $region22: #{dam_embedding_forward.3} parent=19 // pred_check_branch
          %108 = sbr.rel (%p106) target = $region24
        $region23: #{dam_embedding_forward.3} parent=19 // pred_region
          %p109 = scmp.lt.s32.totalorder %s11, 1
          %s110 = scalar_select %p109, %s11, 1
          %s111 = smul.addr %s110, 8
          %s112 = scalar_lea.vmem %s0, %s111
        $region24: #{dam_embedding_forward.3} parent=19 // pred_fallthru
          _
      $region20: #{dam_embedding_forward.3} parent=5 // pred_fallthru
        _
      %p113 = scmp.le.s32.totalorder 1, %s11
      %p114 = scmp.lt.s32.totalorder %s11, 3
      %p115 = pnand %p113, %p114
      %p116 = pneg %p115
      // Predicated region
      $region25: #{dam_embedding_forward.3} parent=5 // pred_check
        _
      $region26: #{dam_embedding_forward.3} parent=5 // pred_check_branch
        %118 = sbr.rel (%p115) target = $region28
      $region27: #{dam_embedding_forward.3} parent=5 // pred_region
        %s119 = ssub.s32 %s11, 1
        %p120 = scmp.lt.s32.totalorder %s16, 1
        %s121 = scalar_select %p120, %s16, 1
        %s122 = smul.addr %s121, 8
        %s123 = scalar_lea.vmem %s0, %s122
        %p124 = pneg %p37
        %p125 = pneg %p34
        %p126 = pneg %p58
        %p127 = pneg %p55
        %p128 = pneg %p84
        %p129 = pneg %p81
        %s130 = sand.u32 %s71, 1
        %s131 = scalar_lea.sflag [#allocation3], %s130
        %s132 = sand.u32 %s71, 1
        %s133 = smul.addr %s132, 16
        %s134 = scalar_lea.vmem [#allocation2], %s133
        %p135 = scmp.lt.s32.totalorder %s16, 1
        %s136 = scalar_select %p135, %s16, 1
        %s137 = smul.addr %s136, 8
        %s138 = scalar_lea.vmem %s0, %s137
        %v139 = vld [vmem:[%s138] sm:$0xff]
        %v140 = vlaneseq
        %v141 = vand.u32 %v140, 127
        %v142 = vadd.s32 %v141, 128
        %v143 = vadd.s32 %v141, 256
        %v144 = vadd.s32 %v141, 384
        %145 = vset.pattern.permute.xlu0 0
        %146 = vperm.xlu0 %145, %v139
        %v147 = vpop.permute.xlu0 %146
        %vm148 = vcmp.eq.s32.totalorder %v141, %v147
        %vm149 = vcmp.eq.s32.totalorder %v142, %v147
        %vm150 = vcmp.eq.s32.totalorder %v143, %v147
        %vm151 = vcmp.eq.s32.totalorder %v144, %v147
        %v152 = vsel %vm148, 1, 0
        %v153 = vsel %vm149, 1, 0
        %v154 = vsel %vm150, 1, 0
        %v155 = vsel %vm151, 1, 0
        %v156 = vcvt.s32.f32 %v152
        %v157 = vcvt.s32.f32 %v153
        %v158 = vcvt.s32.f32 %v154
        %v159 = vcvt.s32.f32 %v155
        %v160 = vld [vmem:[%s1] sm:$0xff]
        %v161 = vld [vmem:[%s1 + $0x8] sm:$0xff]
        %v162 = vld [vmem:[%s1 + $0x10] sm:$0xff]
        %v163 = vld [vmem:[%s1 + $0x18] sm:$0xff]
        %v164 = vld [vmem:[%s1 + $0x20] sm:$0xff]
        %v165 = vld [vmem:[%s1 + $0x28] sm:$0xff]
        %v166 = vld [vmem:[%s1 + $0x30] sm:$0xff]
        %v167 = vld [vmem:[%s1 + $0x38] sm:$0xff]
        %v168 = vld [vmem:[%s1 + $0x40] sm:$0xff]
        %v169 = vld [vmem:[%s1 + $0x48] sm:$0xff]
        %v170 = vld [vmem:[%s1 + $0x50] sm:$0xff]
        %v171 = vld [vmem:[%s1 + $0x58] sm:$0xff]
        %v172 = vld [vmem:[%s1 + $0x60] sm:$0xff]
        %v173 = vld [vmem:[%s1 + $0x68] sm:$0xff]
        %v174 = vld [vmem:[%s1 + $0x70] sm:$0xff]
        %v175 = vld [vmem:[%s1 + $0x78] sm:$0xff]
        %v176 = vld [vmem:[%s1 + $0x80] sm:$0xff]
        %v177 = vld [vmem:[%s1 + $0x88] sm:$0xff]
        %v178 = vld [vmem:[%s1 + $0x90] sm:$0xff]
        %v179 = vld [vmem:[%s1 + $0x98] sm:$0xff]
        %v180 = vld [vmem:[%s1 + $0xa0] sm:$0xff]
        %v181 = vld [vmem:[%s1 + $0xa8] sm:$0xff]
        %v182 = vld [vmem:[%s1 + $0xb0] sm:$0xff]
        %v183 = vld [vmem:[%s1 + $0xb8] sm:$0xff]
        %v184 = vld [vmem:[%s1 + $0xc0] sm:$0xff]
        %v185 = vld [vmem:[%s1 + $0xc8] sm:$0xff]
        %v186 = vld [vmem:[%s1 + $0xd0] sm:$0xff]
        %v187 = vld [vmem:[%s1 + $0xd8] sm:$0xff]
        %v188 = vld [vmem:[%s1 + $0xe0] sm:$0xff]
        %v189 = vld [vmem:[%s1 + $0xe8] sm:$0xff]
        %v190 = vld [vmem:[%s1 + $0xf0] sm:$0xff]
        %v191 = vld [vmem:[%s1 + $0xf8] sm:$0xff]
        %v192 = vld [vmem:[%s1 + $0x100] sm:$0xff]
        %v193 = vld [vmem:[%s1 + $0x108] sm:$0xff]
        %v194 = vld [vmem:[%s1 + $0x110] sm:$0xff]
        %v195 = vld [vmem:[%s1 + $0x118] sm:$0xff]
        %v196 = vld [vmem:[%s1 + $0x120] sm:$0xff]
        %v197 = vld [vmem:[%s1 + $0x128] sm:$0xff]
        %v198 = vld [vmem:[%s1 + $0x130] sm:$0xff]
        %v199 = vld [vmem:[%s1 + $0x138] sm:$0xff]
        %v200 = vld [vmem:[%s1 + $0x140] sm:$0xff]
        %v201 = vld [vmem:[%s1 + $0x148] sm:$0xff]
        %v202 = vld [vmem:[%s1 + $0x150] sm:$0xff]
        %v203 = vld [vmem:[%s1 + $0x158] sm:$0xff]
        %v204 = vld [vmem:[%s1 + $0x160] sm:$0xff]
        %v205 = vld [vmem:[%s1 + $0x168] sm:$0xff]
        %v206 = vld [vmem:[%s1 + $0x170] sm:$0xff]
        %v207 = vld [vmem:[%s1 + $0x178] sm:$0xff]
        %v208 = vld [vmem:[%s1 + $0x180] sm:$0xff]
        %v209 = vld [vmem:[%s1 + $0x188] sm:$0xff]
        %v210 = vld [vmem:[%s1 + $0x190] sm:$0xff]
        %v211 = vld [vmem:[%s1 + $0x198] sm:$0xff]
        %v212 = vld [vmem:[%s1 + $0x1a0] sm:$0xff]
        %v213 = vld [vmem:[%s1 + $0x1a8] sm:$0xff]
        %v214 = vld [vmem:[%s1 + $0x1b0] sm:$0xff]
        %v215 = vld [vmem:[%s1 + $0x1b8] sm:$0xff]
        %v216 = vld [vmem:[%s1 + $0x1c0] sm:$0xff]
        %v217 = vld [vmem:[%s1 + $0x1c8] sm:$0xff]
        %v218 = vld [vmem:[%s1 + $0x1d0] sm:$0xff]
        %v219 = vld [vmem:[%s1 + $0x1d8] sm:$0xff]
        %v220 = vld [vmem:[%s1 + $0x1e0] sm:$0xff]
        %v221 = vld [vmem:[%s1 + $0x1e8] sm:$0xff]
        %v222 = vld [vmem:[%s1 + $0x1f0] sm:$0xff]
        %v223 = vld [vmem:[%s1 + $0x1f8] sm:$0xff]
        %v224 = vld [vmem:[%s1 + $0x200] sm:$0xff]
        %v225 = vld [vmem:[%s1 + $0x208] sm:$0xff]
        %v226 = vld [vmem:[%s1 + $0x210] sm:$0xff]
        %v227 = vld [vmem:[%s1 + $0x218] sm:$0xff]
        %v228 = vld [vmem:[%s1 + $0x220] sm:$0xff]
        %v229 = vld [vmem:[%s1 + $0x228] sm:$0xff]
        %v230 = vld [vmem:[%s1 + $0x230] sm:$0xff]
        %v231 = vld [vmem:[%s1 + $0x238] sm:$0xff]
        %v232 = vld [vmem:[%s1 + $0x240] sm:$0xff]
        %v233 = vld [vmem:[%s1 + $0x248] sm:$0xff]
        %v234 = vld [vmem:[%s1 + $0x250] sm:$0xff]
        %v235 = vld [vmem:[%s1 + $0x258] sm:$0xff]
        %v236 = vld [vmem:[%s1 + $0x260] sm:$0xff]
        %v237 = vld [vmem:[%s1 + $0x268] sm:$0xff]
        %v238 = vld [vmem:[%s1 + $0x270] sm:$0xff]
        %v239 = vld [vmem:[%s1 + $0x278] sm:$0xff]
        %v240 = vld [vmem:[%s1 + $0x280] sm:$0xff]
        %v241 = vld [vmem:[%s1 + $0x288] sm:$0xff]
        %v242 = vld [vmem:[%s1 + $0x290] sm:$0xff]
        %v243 = vld [vmem:[%s1 + $0x298] sm:$0xff]
        %v244 = vld [vmem:[%s1 + $0x2a0] sm:$0xff]
        %v245 = vld [vmem:[%s1 + $0x2a8] sm:$0xff]
        %v246 = vld [vmem:[%s1 + $0x2b0] sm:$0xff]
        %v247 = vld [vmem:[%s1 + $0x2b8] sm:$0xff]
        %v248 = vld [vmem:[%s1 + $0x2c0] sm:$0xff]
        %v249 = vld [vmem:[%s1 + $0x2c8] sm:$0xff]
        %v250 = vld [vmem:[%s1 + $0x2d0] sm:$0xff]
        %v251 = vld [vmem:[%s1 + $0x2d8] sm:$0xff]
        %v252 = vld [vmem:[%s1 + $0x2e0] sm:$0xff]
        %v253 = vld [vmem:[%s1 + $0x2e8] sm:$0xff]
        %v254 = vld [vmem:[%s1 + $0x2f0] sm:$0xff]
        %v255 = vld [vmem:[%s1 + $0x2f8] sm:$0xff]
        %v256 = vld [vmem:[%s1 + $0x300] sm:$0xff]
        %v257 = vld [vmem:[%s1 + $0x308] sm:$0xff]
        %v258 = vld [vmem:[%s1 + $0x310] sm:$0xff]
        %v259 = vld [vmem:[%s1 + $0x318] sm:$0xff]
        %v260 = vld [vmem:[%s1 + $0x320] sm:$0xff]
        %v261 = vld [vmem:[%s1 + $0x328] sm:$0xff]
        %v262 = vld [vmem:[%s1 + $0x330] sm:$0xff]
        %v263 = vld [vmem:[%s1 + $0x338] sm:$0xff]
        %v264 = vld [vmem:[%s1 + $0x340] sm:$0xff]
        %v265 = vld [vmem:[%s1 + $0x348] sm:$0xff]
        %v266 = vld [vmem:[%s1 + $0x350] sm:$0xff]
        %v267 = vld [vmem:[%s1 + $0x358] sm:$0xff]
        %v268 = vld [vmem:[%s1 + $0x360] sm:$0xff]
        %v269 = vld [vmem:[%s1 + $0x368] sm:$0xff]
        %v270 = vld [vmem:[%s1 + $0x370] sm:$0xff]
        %v271 = vld [vmem:[%s1 + $0x378] sm:$0xff]
        %v272 = vld [vmem:[%s1 + $0x380] sm:$0xff]
        %v273 = vld [vmem:[%s1 + $0x388] sm:$0xff]
        %v274 = vld [vmem:[%s1 + $0x390] sm:$0xff]
        %v275 = vld [vmem:[%s1 + $0x398] sm:$0xff]
        %v276 = vld [vmem:[%s1 + $0x3a0] sm:$0xff]
        %v277 = vld [vmem:[%s1 + $0x3a8] sm:$0xff]
        %v278 = vld [vmem:[%s1 + $0x3b0] sm:$0xff]
        %v279 = vld [vmem:[%s1 + $0x3b8] sm:$0xff]
        %v280 = vld [vmem:[%s1 + $0x3c0] sm:$0xff]
        %v281 = vld [vmem:[%s1 + $0x3c8] sm:$0xff]
        %v282 = vld [vmem:[%s1 + $0x3d0] sm:$0xff]
        %v283 = vld [vmem:[%s1 + $0x3d8] sm:$0xff]
        %v284 = vld [vmem:[%s1 + $0x3e0] sm:$0xff]
        %v285 = vld [vmem:[%s1 + $0x3e8] sm:$0xff]
        %v286 = vld [vmem:[%s1 + $0x3f0] sm:$0xff]
        %v287 = vld [vmem:[%s1 + $0x3f8] sm:$0xff]
        %288 = vmatprep.subr.mxu0 %v191
        %289 = vmatpush1.msra.mxu0 %v190
        %290 = vmatprep.subr.mxu0 %v189
        %291 = vmatpush1.msra.mxu0 %v188
        %292 = vmatprep.subr.mxu0 %v187
        %293 = vmatpush1.msra.mxu0 %v186
        %294 = vmatprep.subr.mxu0 %v185
        %295 = vmatpush1.msra.mxu0 %v184
        %296 = vmatprep.subr.mxu0 %v183
        %297 = vmatpush1.msra.mxu0 %v182
        %298 = vmatprep.subr.mxu0 %v181
        %299 = vmatpush1.msra.mxu0 %v180
        %300 = vmatprep.subr.mxu0 %v179
        %301 = vmatpush1.msra.mxu0 %v178
        %302 = vmatprep.subr.mxu0 %v177
        %303 = vmatpush1.msra.mxu0 %v176
        %304 = vmatprep.subr.mxu0 %v175
        %305 = vmatpush1.msra.mxu0 %v174
        %306 = vmatprep.subr.mxu0 %v173
        %307 = vmatpush1.msra.mxu0 %v172
        %308 = vmatprep.subr.mxu0 %v171
        %309 = vmatpush1.msra.mxu0 %v170
        %310 = vmatprep.subr.mxu0 %v169
        %311 = vmatpush1.msra.mxu0 %v168
        %312 = vmatprep.subr.mxu0 %v167
        %313 = vmatpush1.msra.mxu0 %v166
        %314 = vmatprep.subr.mxu0 %v165
        %315 = vmatpush1.msra.mxu0 %v164
        %316 = vmatprep.subr.mxu0 %v163
        %317 = vmatpush1.msra.mxu0 %v162
        %318 = vmatprep.subr.mxu0 %v161
        %319 = vmatpush1.msra.mxu0 %v160
        %320 = vmatprep.subr.mxu0 %v223
        %321 = vmatpush2.msra.mxu0 %v222
        %322 = vmatprep.subr.mxu0 %v221
        %323 = vmatpush2.msra.mxu0 %v220
        %324 = vmatprep.subr.mxu0 %v219
        %325 = vmatpush2.msra.mxu0 %v218
        %326 = vmatprep.subr.mxu0 %v217
        %327 = vmatpush2.msra.mxu0 %v216
        %328 = vmatprep.subr.mxu0 %v215
        %329 = vmatpush2.msra.mxu0 %v214
        %330 = vmatprep.subr.mxu0 %v213
        %331 = vmatpush2.msra.mxu0 %v212
        %332 = vmatprep.subr.mxu0 %v211
        %333 = vmatpush2.msra.mxu0 %v210
        %334 = vmatprep.subr.mxu0 %v209
        %335 = vmatpush2.msra.mxu0 %v208
        %336 = vmatprep.subr.mxu0 %v207
        %337 = vmatpush2.msra.mxu0 %v206
        %338 = vmatprep.subr.mxu0 %v205
        %339 = vmatpush2.msra.mxu0 %v204
        %340 = vmatprep.subr.mxu0 %v203
        %341 = vmatpush2.msra.mxu0 %v202
        %342 = vmatprep.subr.mxu0 %v201
        %343 = vmatpush2.msra.mxu0 %v200
        %344 = vmatprep.subr.mxu0 %v199
        %345 = vmatpush2.msra.mxu0 %v198
        %346 = vmatprep.subr.mxu0 %v197
        %347 = vmatpush2.msra.mxu0 %v196
        %348 = vmatprep.subr.mxu0 %v195
        %349 = vmatpush2.msra.mxu0 %v194
        %350 = vmatprep.subr.mxu0 %v193
        %351 = vmatpush2.msra.mxu0 %v192
        %352 = vmatprep.mubr.f32.mxu0 %v157
        %353 = vmatmul.mubr.f32.gmra.mxu0 %v156
        %v354 = vpop.f32.mrf.mxu0
        %v355 = vadd.f32 0.0, %v354
        %v356 = vpop.f32.mrf.mxu0
        %v357 = vadd.f32 0.0, %v356
        %358 = vdwg.mxu0
        %359 = vmatprep.subr.mxu0 %v255
        %360 = vmatpush1.msra.mxu0 %v254
        %361 = vmatprep.subr.mxu0 %v253
        %362 = vmatpush1.msra.mxu0 %v252
        %363 = vmatprep.subr.mxu0 %v251
        %364 = vmatpush1.msra.mxu0 %v250
        %365 = vmatprep.subr.mxu0 %v249
        %366 = vmatpush1.msra.mxu0 %v248
        %367 = vmatprep.subr.mxu0 %v247
        %368 = vmatpush1.msra.mxu0 %v246
        %369 = vmatprep.subr.mxu0 %v245
        %370 = vmatpush1.msra.mxu0 %v244
        %371 = vmatprep.subr.mxu0 %v243
        %372 = vmatpush1.msra.mxu0 %v242
        %373 = vmatprep.subr.mxu0 %v241
        %374 = vmatpush1.msra.mxu0 %v240
        %375 = vmatprep.subr.mxu0 %v239
        %376 = vmatpush1.msra.mxu0 %v238
        %377 = vmatprep.subr.mxu0 %v237
        %378 = vmatpush1.msra.mxu0 %v236
        %379 = vmatprep.subr.mxu0 %v235
        %380 = vmatpush1.msra.mxu0 %v234
        %381 = vmatprep.subr.mxu0 %v233
        %382 = vmatpush1.msra.mxu0 %v232
        %383 = vmatprep.subr.mxu0 %v231
        %384 = vmatpush1.msra.mxu0 %v230
        %385 = vmatprep.subr.mxu0 %v229
        %386 = vmatpush1.msra.mxu0 %v228
        %387 = vmatprep.subr.mxu0 %v227
        %388 = vmatpush1.msra.mxu0 %v226
        %389 = vmatprep.subr.mxu0 %v225
        %390 = vmatpush1.msra.mxu0 %v224
        %391 = vmatprep.subr.mxu0 %v287
        %392 = vmatpush2.msra.mxu0 %v286
        %393 = vmatprep.subr.mxu0 %v285
        %394 = vmatpush2.msra.mxu0 %v284
        %395 = vmatprep.subr.mxu0 %v283
        %396 = vmatpush2.msra.mxu0 %v282
        %397 = vmatprep.subr.mxu0 %v281
        %398 = vmatpush2.msra.mxu0 %v280
        %399 = vmatprep.subr.mxu0 %v279
        %400 = vmatpush2.msra.mxu0 %v278
        %401 = vmatprep.subr.mxu0 %v277
        %402 = vmatpush2.msra.mxu0 %v276
        %403 = vmatprep.subr.mxu0 %v275
        %404 = vmatpush2.msra.mxu0 %v274
        %405 = vmatprep.subr.mxu0 %v273
        %406 = vmatpush2.msra.mxu0 %v272
        %407 = vmatprep.subr.mxu0 %v271
        %408 = vmatpush2.msra.mxu0 %v270
        %409 = vmatprep.subr.mxu0 %v269
        %410 = vmatpush2.msra.mxu0 %v268
        %411 = vmatprep.subr.mxu0 %v267
        %412 = vmatpush2.msra.mxu0 %v266
        %413 = vmatprep.subr.mxu0 %v265
        %414 = vmatpush2.msra.mxu0 %v264
        %415 = vmatprep.subr.mxu0 %v263
        %416 = vmatpush2.msra.mxu0 %v262
        %417 = vmatprep.subr.mxu0 %v261
        %418 = vmatpush2.msra.mxu0 %v260
        %419 = vmatprep.subr.mxu0 %v259
        %420 = vmatpush2.msra.mxu0 %v258
        %421 = vmatprep.subr.mxu0 %v257
        %422 = vmatpush2.msra.mxu0 %v256
        %423 = vmatprep.mubr.f32.mxu0 %v159
        %424 = vmatmul.mubr.f32.gmra.mxu0 %v158
        %v425 = vpop.f32.mrf.mxu0
        %v426 = vadd.f32 %v355, %v425
        %v427 = vpop.f32.mrf.mxu0
        %v428 = vadd.f32 %v357, %v427
        %429 = vdwg.mxu0
        %430 = vst [vmem:[%s134] sm:$0xff] %v426
        %431 = vst [vmem:[%s134 + $0x8] sm:$0xff] %v428
        %s432 = sand.u32 %s71, 1
        %s433 = scalar_lea.sflag [#allocation3], %s432
        %s434 = sand.u32 %s71, 1
        %s435 = smul.addr %s434, 16
        %s436 = scalar_lea.vmem [#allocation2], %s435
        // Predicated region
        $region29: #{dam_embedding_forward.3} parent=27 // pred_check
          %p437 = pneg %p81
        $region30: #{dam_embedding_forward.3} parent=27 // pred_check_branch
          %439 = sbr.rel (%p437) target = $region32
        $region31: #{dam_embedding_forward.3} parent=27 // pred_region
          %s441 = ssub.s32 256, 256
          %442 = vsyncadd %s433, %s441
          %s443 = smul.addr %s16, 2
          %s444 = smul.addr %s443, 128
          %s445 = scalar_lea.hbm %s2, %s444
          %s447 = sshll.u32 %s436, 4
          %s448 = int_to_ptr.vmem [resolvable:$true] %s447
          %450 = dma.vmem_to_hbm [thread:$0]  %s448, 256, %s445, %s433
        $region32: #{dam_embedding_forward.3} parent=27 // pred_fallthru
          _
      $region28: #{dam_embedding_forward.3} parent=5 // pred_fallthru
        _
      %p451 = scmp.le.s32.totalorder 2, %s11
      // Predicated region
      $region33: #{dam_embedding_forward.3} parent=5 // pred_check
        %p452 = pneg %p451
      $region34: #{dam_embedding_forward.3} parent=5 // pred_check_branch
        %454 = sbr.rel (%p452) target = $region36
      $region35: #{dam_embedding_forward.3} parent=5 // pred_region
        %s455 = ssub.s32 %s11, 2
        // Predicated region
        $region37: #{dam_embedding_forward.3} parent=35 // pred_check
          %p456 = pneg %p87
        $region38: #{dam_embedding_forward.3} parent=35 // pred_check_branch
          %458 = sbr.rel (%p456) target = $region40
        $region39: #{dam_embedding_forward.3} parent=35 // pred_region
          %s459 = sand.u32 %s72, 1
          %s460 = scalar_lea.sflag [#allocation3], %s459
          %s461 = sand.u32 %s72, 1
          %s462 = smul.addr %s461, 16
          %s463 = scalar_lea.vmem [#allocation2], %s462
          %464 = dma.done %s460, 256
        $region40: #{dam_embedding_forward.3} parent=35 // pred_fallthru
          _
      $region36: #{dam_embedding_forward.3} parent=5 // pred_fallthru
        _
    $region6: #{dam_embedding_forward.3} parent=1 // loop_footer
      %s15 = sadd.s32 1, %s11
    $region7: #{dam_embedding_forward.3} parent=1 // loop_footer_branch
      %10 = sbr.rel target = $region3
    $region8: #{dam_embedding_forward.3} parent=1 // loop_exit
      _
    %465 = vsyncpa [#allocation3], 1
    %s466 = scalar_lea.sflag [#allocation3], 1
    %467 = vsyncpa %s466, 1

// kernel: dam_embedding_forward.2
$region0: #{dam_embedding_forward.2}
  #allocation0 [shape = 'u32[]', space=smem, size = 0x4, offset = 0x4, fixed_abs, tag = 'smem constant byte address 0x4 - core index']
  #allocation1 [shape = 'u32[144,128]{1,0:T(1,128)}', space=vmem, size = 0x12000, scoped, tag = 'internal scratch']
  %s0 = inlined_call_operand.vmem [shape: f32[3,256], index: 0, kind: input, shape index: {}]
  %s1 = inlined_call_operand.hbm [shape: f32[512,256], index: 1, kind: input, shape index: {}]
  %s2 = inlined_call_operand.hbm [shape: f32[512,256], index: 2, kind: input, shape index: {}]
  %s3 = inlined_call_operand.hbm [shape: f32[512,256], index: 3, kind: input, shape index: {}]
  %s4 = inlined_call_operand.vmem [shape: f32[512,256], index: 4, kind: output, shape index: {}]
  %s5 = sld [smem:[#allocation0]]
  $region38: #{dam_embedding_forward.2} parent=0
    _
  %s7 = ssub.s32 1, %s5
  %s8 = scalar_select 0, %s7, %s5
  $region1: #{dam_embedding_forward.2} parent=0
    #allocation2 [shape = 'u8[524288]{0}', space=vmem, size = 0x80000, scoped, tag = 'input window, operand 1, single buffered']
    #allocation3 [shape = 's32[1]{0}', space=sflag, size = 0x4, scoped, tag = 'scoped memory for dam_embedding_forward.2']
    #allocation4 [shape = 'u8[524288]{0}', space=vmem, size = 0x80000, scoped, tag = 'input window, operand 2, single buffered']
    #allocation5 [shape = 's32[1]{0}', space=sflag, size = 0x4, scoped, tag = 'scoped memory for dam_embedding_forward.2']
    #allocation6 [shape = 'u8[524288]{0}', space=vmem, size = 0x80000, scoped, tag = 'input window, operand 3, single buffered']
    %9 = vsyncpa [#allocation3], 0
    %10 = vsyncpa [#allocation5], 0
    // Predicated region
    $region2: #{dam_embedding_forward.2} parent=1 // pred_check
      _
    $region3: #{dam_embedding_forward.2} parent=1 // pred_check_branch
      %12 = sbr.rel (0) target = $region5
    $region4: #{dam_embedding_forward.2} parent=1 // pred_region
      _
    $region5: #{dam_embedding_forward.2} parent=1 // pred_fallthru
      _
    // Predicated region
    $region6: #{dam_embedding_forward.2} parent=1 // pred_check
      _
    $region7: #{dam_embedding_forward.2} parent=1 // pred_check_branch
      %14 = sbr.rel (0) target = $region9
    $region8: #{dam_embedding_forward.2} parent=1 // pred_region
      %s16 = ssub.s32 16384, 16384
      %17 = vsyncadd [#allocation3], %s16
      %s18 = sshll.u32 [#allocation2], 4
      %s19 = int_to_ptr.vmem [resolvable:$true] %s18
      %24 = dma.hbm_to_vmem [thread:$0]  %s1, 16384, %s19, [#allocation3], 256, 256, 16
    $region9: #{dam_embedding_forward.2} parent=1 // pred_fallthru
      _
    // Predicated region
    $region10: #{dam_embedding_forward.2} parent=1 // pred_check
      _
    $region11: #{dam_embedding_forward.2} parent=1 // pred_check_branch
      %26 = sbr.rel (0) target = $region13
    $region12: #{dam_embedding_forward.2} parent=1 // pred_region
      %s28 = ssub.s32 16384, 16384
      %29 = vsyncadd [#allocation5], %s28
      %s30 = sshll.u32 [#allocation4], 4
      %s31 = int_to_ptr.vmem [resolvable:$true] %s30
      %36 = dma.hbm_to_vmem [thread:$0]  %s2, 16384, %s31, [#allocation5], 256, 256, 16
    $region13: #{dam_embedding_forward.2} parent=1 // pred_fallthru
      _
    // Predicated region
    $region14: #{dam_embedding_forward.2} parent=1 // pred_check
      _
    $region15: #{dam_embedding_forward.2} parent=1 // pred_check_branch
      %38 = sbr.rel (0) target = $region17
    $region16: #{dam_embedding_forward.2} parent=1 // pred_region
      %s40 = ssub.s32 16384, 16384
      %41 = vsyncadd [#allocation5], %s40
      %s42 = sshll.u32 [#allocation6], 4
      %s43 = int_to_ptr.vmem [resolvable:$true] %s42
      %48 = dma.hbm_to_vmem [thread:$0]  %s3, 16384, %s43, [#allocation5], 256, 256, 16
    $region17: #{dam_embedding_forward.2} parent=1 // pred_fallthru
      _
    // Predicated region
    $region18: #{dam_embedding_forward.2} parent=1 // pred_check
      _
    $region19: #{dam_embedding_forward.2} parent=1 // pred_check_branch
      %50 = sbr.rel (0) target = $region21
    $region20: #{dam_embedding_forward.2} parent=1 // pred_region
      %51 = dma.done [#allocation3], 16384
    $region21: #{dam_embedding_forward.2} parent=1 // pred_fallthru
      _
    // Predicated region
    $region22: #{dam_embedding_forward.2} parent=1 // pred_check
      _
    $region23: #{dam_embedding_forward.2} parent=1 // pred_check_branch
      %53 = sbr.rel (0) target = $region25
    $region24: #{dam_embedding_forward.2} parent=1 // pred_region
      %54 = dma.done [#allocation5], 16384
    $region25: #{dam_embedding_forward.2} parent=1 // pred_fallthru
      _
    // Predicated region
    $region26: #{dam_embedding_forward.2} parent=1 // pred_check
      _
    $region27: #{dam_embedding_forward.2} parent=1 // pred_check_branch
      %56 = sbr.rel (0) target = $region29
    $region28: #{dam_embedding_forward.2} parent=1 // pred_region
      %57 = dma.done [#allocation5], 16384
    $region29: #{dam_embedding_forward.2} parent=1 // pred_fallthru
      _
    %v58 = vld [vmem:[%s0] sm:$0x77]
    %v59 = vld [vmem:[#allocation2] sm:$0xff]
    %v60 = vld [vmem:[#allocation2 + $0x8] sm:$0xff]
    %v61 = vld [vmem:[#allocation2 + $0x10] sm:$0xff]
    %v62 = vld [vmem:[#allocation2 + $0x18] sm:$0xff]
    %v63 = vld [vmem:[#allocation2 + $0x20] sm:$0xff]
    %v64 = vld [vmem:[#allocation2 + $0x28] sm:$0xff]
    %v65 = vld [vmem:[#allocation2 + $0x30] sm:$0xff]
    %v66 = vld [vmem:[#allocation2 + $0x38] sm:$0xff]
    %v67 = vld [vmem:[#allocation2 + $0x40] sm:$0xff]
    %v68 = vld [vmem:[#allocation2 + $0x48] sm:$0xff]
    %v69 = vld [vmem:[#allocation2 + $0x50] sm:$0xff]
    %v70 = vld [vmem:[#allocation2 + $0x58] sm:$0xff]
    %v71 = vld [vmem:[#allocation2 + $0x60] sm:$0xff]
    %v72 = vld [vmem:[#allocation2 + $0x68] sm:$0xff]
    %v73 = vld [vmem:[#allocation2 + $0x70] sm:$0xff]
    %v74 = vld [vmem:[#allocation2 + $0x78] sm:$0xff]
    %v75 = vld [vmem:[#allocation2 + $0x80] sm:$0xff]
    %v76 = vld [vmem:[#allocation2 + $0x88] sm:$0xff]
    %v77 = vld [vmem:[#allocation2 + $0x90] sm:$0xff]
    %v78 = vld [vmem:[#allocation2 + $0x98] sm:$0xff]
    %v79 = vld [vmem:[#allocation2 + $0xa0] sm:$0xff]
    %v80 = vld [vmem:[#allocation2 + $0xa8] sm:$0xff]
    %v81 = vld [vmem:[#allocation2 + $0xb0] sm:$0xff]
    %v82 = vld [vmem:[#allocation2 + $0xb8] sm:$0xff]
    %v83 = vld [vmem:[#allocation2 + $0xc0] sm:$0xff]
    %v84 = vld [vmem:[#allocation2 + $0xc8] sm:$0xff]
    %v85 = vld [vmem:[#allocation2 + $0xd0] sm:$0xff]
    %v86 = vld [vmem:[#allocation2 + $0xd8] sm:$0xff]
    %v87 = vld [vmem:[#allocation2 + $0xe0] sm:$0xff]
    %v88 = vld [vmem:[#allocation2 + $0xe8] sm:$0xff]
    %v89 = vld [vmem:[#allocation2 + $0xf0] sm:$0xff]
    %v90 = vld [vmem:[#allocation2 + $0xf8] sm:$0xff]
    %v91 = vld [vmem:[#allocation2 + $0x100] sm:$0xff]
    %v92 = vld [vmem:[#allocation2 + $0x108] sm:$0xff]
    %v93 = vld [vmem:[#allocation2 + $0x110] sm:$0xff]
    %v94 = vld [vmem:[#allocation2 + $0x118] sm:$0xff]
    %v95 = vld [vmem:[#allocation2 + $0x120] sm:$0xff]
    %v96 = vld [vmem:[#allocation2 + $0x128] sm:$0xff]
    %v97 = vld [vmem:[#allocation2 + $0x130] sm:$0xff]
    %v98 = vld [vmem:[#allocation2 + $0x138] sm:$0xff]
    %v99 = vld [vmem:[#allocation2 + $0x140] sm:$0xff]
    %v100 = vld [vmem:[#allocation2 + $0x148] sm:$0xff]
    %v101 = vld [vmem:[#allocation2 + $0x150] sm:$0xff]
    %v102 = vld [vmem:[#allocation2 + $0x158] sm:$0xff]
    %v103 = vld [vmem:[#allocation2 + $0x160] sm:$0xff]
    %v104 = vld [vmem:[#allocation2 + $0x168] sm:$0xff]
    %v105 = vld [vmem:[#allocation2 + $0x170] sm:$0xff]
    %v106 = vld [vmem:[#allocation2 + $0x178] sm:$0xff]
    %v107 = vld [vmem:[#allocation2 + $0x180] sm:$0xff]
    %v108 = vld [vmem:[#allocation2 + $0x188] sm:$0xff]
    %v109 = vld [vmem:[#allocation2 + $0x190] sm:$0xff]
    %v110 = vld [vmem:[#allocation2 + $0x198] sm:$0xff]
    %v111 = vld [vmem:[#allocation2 + $0x1a0] sm:$0xff]
    %v112 = vld [vmem:[#allocation2 + $0x1a8] sm:$0xff]
    %v113 = vld [vmem:[#allocation2 + $0x1b0] sm:$0xff]
    %v114 = vld [vmem:[#allocation2 + $0x1b8] sm:$0xff]
    %v115 = vld [vmem:[#allocation2 + $0x1c0] sm:$0xff]
    %v116 = vld [vmem:[#allocation2 + $0x1c8] sm:$0xff]
    %v117 = vld [vmem:[#allocation2 + $0x1d0] sm:$0xff]
    %v118 = vld [vmem:[#allocation2 + $0x1d8] sm:$0xff]
    %v119 = vld [vmem:[#allocation2 + $0x1e0] sm:$0xff]
    %v120 = vld [vmem:[#allocation2 + $0x1e8] sm:$0xff]
    %v121 = vld [vmem:[#allocation2 + $0x1f0] sm:$0xff]
    %v122 = vld [vmem:[#allocation2 + $0x1f8] sm:$0xff]
    %v123 = vld [vmem:[#allocation2 + $0x200] sm:$0xff]
    %v124 = vld [vmem:[#allocation2 + $0x208] sm:$0xff]
    %v125 = vld [vmem:[#allocation2 + $0x210] sm:$0xff]
    %v126 = vld [vmem:[#allocation2 + $0x218] sm:$0xff]
    %v127 = vld [vmem:[#allocation2 + $0x220] sm:$0xff]
    %v128 = vld [vmem:[#allocation2 + $0x228] sm:$0xff]
    %v129 = vld [vmem:[#allocation2 + $0x230] sm:$0xff]
    %v130 = vld [vmem:[#allocation2 + $0x238] sm:$0xff]
    %v131 = vld [vmem:[#allocation2 + $0x240] sm:$0xff]
    %v132 = vld [vmem:[#allocation2 + $0x248] sm:$0xff]
    %v133 = vld [vmem:[#allocation2 + $0x250] sm:$0xff]
    %v134 = vld [vmem:[#allocation2 + $0x258] sm:$0xff]
    %v135 = vld [vmem:[#allocation2 + $0x260] sm:$0xff]
    %v136 = vld [vmem:[#allocation2 + $0x268] sm:$0xff]
    %v137 = vld [vmem:[#allocation2 + $0x270] sm:$0xff]
    %v138 = vld [vmem:[#allocation2 + $0x278] sm:$0xff]
    %v139 = vld [vmem:[#allocation2 + $0x280] sm:$0xff]
    %v140 = vld [vmem:[#allocation2 + $0x288] sm:$0xff]
    %v141 = vld [vmem:[#allocation2 + $0x290] sm:$0xff]
    %v142 = vld [vmem:[#allocation2 + $0x298] sm:$0xff]
    %v143 = vld [vmem:[#allocation2 + $0x2a0] sm:$0xff]
    %v144 = vld [vmem:[#allocation2 + $0x2a8] sm:$0xff]
    %v145 = vld [vmem:[#allocation2 + $0x2b0] sm:$0xff]
    %v146 = vld [vmem:[#allocation2 + $0x2b8] sm:$0xff]
    %v147 = vld [vmem:[#allocation2 + $0x2c0] sm:$0xff]
    %v148 = vld [vmem:[#allocation2 + $0x2c8] sm:$0xff]
    %v149 = vld [vmem:[#allocation2 + $0x2d0] sm:$0xff]
    %v150 = vld [vmem:[#allocation2 + $0x2d8] sm:$0xff]
    %v151 = vld [vmem:[#allocation2 + $0x2e0] sm:$0xff]
    %v152 = vld [vmem:[#allocation2 + $0x2e8] sm:$0xff]
    %v153 = vld [vmem:[#allocation2 + $0x2f0] sm:$0xff]
    %v154 = vld [vmem:[#allocation2 + $0x2f8] sm:$0xff]
    %v155 = vld [vmem:[#allocation2 + $0x300] sm:$0xff]
    %v156 = vld [vmem:[#allocation2 + $0x308] sm:$0xff]
    %v157 = vld [vmem:[#allocation2 + $0x310] sm:$0xff]
    %v158 = vld [vmem:[#allocation2 + $0x318] sm:$0xff]
    %v159 = vld [vmem:[#allocation2 + $0x320] sm:$0xff]
    %v160 = vld [vmem:[#allocation2 + $0x328] sm:$0xff]
    %v161 = vld [vmem:[#allocation2 + $0x330] sm:$0xff]
    %v162 = vld [vmem:[#allocation2 + $0x338] sm:$0xff]
    %v163 = vld [vmem:[#allocation2 + $0x340] sm:$0xff]
    %v164 = vld [vmem:[#allocation2 + $0x348] sm:$0xff]
    %v165 = vld [vmem:[#allocation2 + $0x350] sm:$0xff]
    %v166 = vld [vmem:[#allocation2 + $0x358] sm:$0xff]
    %v167 = vld [vmem:[#allocation2 + $0x360] sm:$0xff]
    %v168 = vld [vmem:[#allocation2 + $0x368] sm:$0xff]
    %v169 = vld [vmem:[#allocation2 + $0x370] sm:$0xff]
    %v170 = vld [vmem:[#allocation2 + $0x378] sm:$0xff]
    %v171 = vld [vmem:[#allocation2 + $0x380] sm:$0xff]
    %v172 = vld [vmem:[#allocation2 + $0x388] sm:$0xff]
    %v173 = vld [vmem:[#allocation2 + $0x390] sm:$0xff]
    %v174 = vld [vmem:[#allocation2 + $0x398] sm:$0xff]
    %v175 = vld [vmem:[#allocation2 + $0x3a0] sm:$0xff]
    %v176 = vld [vmem:[#allocation2 + $0x3a8] sm:$0xff]
    %v177 = vld [vmem:[#allocation2 + $0x3b0] sm:$0xff]
    %v178 = vld [vmem:[#allocation2 + $0x3b8] sm:$0xff]
    %v179 = vld [vmem:[#allocation2 + $0x3c0] sm:$0xff]
    %v180 = vld [vmem:[#allocation2 + $0x3c8] sm:$0xff]
    %v181 = vld [vmem:[#allocation2 + $0x3d0] sm:$0xff]
    %v182 = vld [vmem:[#allocation2 + $0x3d8] sm:$0xff]
    %v183 = vld [vmem:[#allocation2 + $0x3e0] sm:$0xff]
    %v184 = vld [vmem:[#allocation2 + $0x3e8] sm:$0xff]
    %v185 = vld [vmem:[#allocation2 + $0x3f0] sm:$0xff]
    %v186 = vld [vmem:[#allocation2 + $0x3f8] sm:$0xff]
    %v188 = vlaneseq
    %v189 = vshrl.u32 %v188, 7
    %v190 = vsub.s32 0, %v189
    %v191 = vrot.slane %v58, %v190
    %v192 = vlaneseq
    %v193 = vshrl.u32 %v192, 7
    %v194 = vsub.s32 4, %v193
    %v195 = vrot.slane %v58, %v194
    %v198 = vlaneseq
    %v199 = vshrl.u32 %v198, 7
    %v200 = vsub.s32 0, %v199
    %v201 = vrot.slane %v191, %v200
    %v202 = vlaneseq
    %v203 = vshrl.u32 %v202, 7
    %v204 = vsub.s32 0, %v203
    %v205 = vrot.slane %v195, %v204
    %v206 = vmul.f32 %v201, %v59
    %v207 = vmul.f32 %v205, %v60
    %v208 = vmul.f32 %v201, %v61
    %v209 = vmul.f32 %v205, %v62
    %v210 = vmul.f32 %v201, %v63
    %v211 = vmul.f32 %v205, %v64
    %v212 = vmul.f32 %v201, %v65
    %v213 = vmul.f32 %v205, %v66
    %v214 = vmul.f32 %v201, %v67
    %v215 = vmul.f32 %v205, %v68
    %v216 = vmul.f32 %v201, %v69
    %v217 = vmul.f32 %v205, %v70
    %v218 = vmul.f32 %v201, %v71
    %v219 = vmul.f32 %v205, %v72
    %v220 = vmul.f32 %v201, %v73
    %v221 = vmul.f32 %v205, %v74
    %v222 = vmul.f32 %v201, %v75
    %v223 = vmul.f32 %v205, %v76
    %v224 = vmul.f32 %v201, %v77
    %v225 = vmul.f32 %v205, %v78
    %v226 = vmul.f32 %v201, %v79
    %v227 = vmul.f32 %v205, %v80
    %v228 = vmul.f32 %v201, %v81
    %v229 = vmul.f32 %v205, %v82
    %v230 = vmul.f32 %v201, %v83
    %v231 = vmul.f32 %v205, %v84
    %v232 = vmul.f32 %v201, %v85
    %v233 = vmul.f32 %v205, %v86
    %v234 = vmul.f32 %v201, %v87
    %v235 = vmul.f32 %v205, %v88
    %v236 = vmul.f32 %v201, %v89
    %v237 = vmul.f32 %v205, %v90
    %v238 = vmul.f32 %v201, %v91
    %v239 = vmul.f32 %v205, %v92
    %v240 = vmul.f32 %v201, %v93
    %v241 = vmul.f32 %v205, %v94
    %v242 = vmul.f32 %v201, %v95
    %v243 = vmul.f32 %v205, %v96
    %v244 = vmul.f32 %v201, %v97
    %v245 = vmul.f32 %v205, %v98
    %v246 = vmul.f32 %v201, %v99
    %v247 = vmul.f32 %v205, %v100
    %v248 = vmul.f32 %v201, %v101
    %v249 = vmul.f32 %v205, %v102
    %v250 = vmul.f32 %v201, %v103
    %v251 = vmul.f32 %v205, %v104
    %v252 = vmul.f32 %v201, %v105
    %v253 = vmul.f32 %v205, %v106
    %v254 = vmul.f32 %v201, %v107
    %v255 = vmul.f32 %v205, %v108
    %v256 = vmul.f32 %v201, %v109
    %v257 = vmul.f32 %v205, %v110
    %v258 = vmul.f32 %v201, %v111
    %v259 = vmul.f32 %v205, %v112
    %v260 = vmul.f32 %v201, %v113
    %v261 = vmul.f32 %v205, %v114
    %v262 = vmul.f32 %v201, %v115
    %v263 = vmul.f32 %v205, %v116
    %v264 = vmul.f32 %v201, %v117
    %v265 = vmul.f32 %v205, %v118
    %v266 = vmul.f32 %v201, %v119
    %v267 = vmul.f32 %v205, %v120
    %v268 = vmul.f32 %v201, %v121
    %v269 = vmul.f32 %v205, %v122
    %v270 = vmul.f32 %v201, %v123
    %v271 = vmul.f32 %v205, %v124
    %v272 = vmul.f32 %v201, %v125
    %v273 = vmul.f32 %v205, %v126
    %v274 = vmul.f32 %v201, %v127
    %v275 = vmul.f32 %v205, %v128
    %v276 = vmul.f32 %v201, %v129
    %v277 = vmul.f32 %v205, %v130
    %v278 = vmul.f32 %v201, %v131
    %v279 = vmul.f32 %v205, %v132
    %v280 = vmul.f32 %v201, %v133
    %v281 = vmul.f32 %v205, %v134
    %v282 = vmul.f32 %v201, %v135
    %v283 = vmul.f32 %v205, %v136
    %v284 = vmul.f32 %v201, %v137
    %v285 = vmul.f32 %v205, %v138
    %v286 = vmul.f32 %v201, %v139
    %v287 = vmul.f32 %v205, %v140
    %v288 = vmul.f32 %v201, %v141
    %v289 = vmul.f32 %v205, %v142
    %v290 = vmul.f32 %v201, %v143
    %v291 = vmul.f32 %v205, %v144
    %v292 = vmul.f32 %v201, %v145
    %v293 = vmul.f32 %v205, %v146
    %v294 = vmul.f32 %v201, %v147
    %v295 = vmul.f32 %v205, %v148
    %v296 = vmul.f32 %v201, %v149
    %v297 = vmul.f32 %v205, %v150
    %v298 = vmul.f32 %v201, %v151
    %v299 = vmul.f32 %v205, %v152
    %v300 = vmul.f32 %v201, %v153
    %v301 = vmul.f32 %v205, %v154
    %v302 = vmul.f32 %v201, %v155
    %v303 = vmul.f32 %v205, %v156
    %v304 = vmul.f32 %v201, %v157
    %v305 = vmul.f32 %v205, %v158
    %v306 = vmul.f32 %v201, %v159
    %v307 = vmul.f32 %v205, %v160
    %v308 = vmul.f32 %v201, %v161
    %v309 = vmul.f32 %v205, %v162
    %v310 = vmul.f32 %v201, %v163
    %v311 = vmul.f32 %v205, %v164
    %v312 = vmul.f32 %v201, %v165
    %v313 = vmul.f32 %v205, %v166
    %v314 = vmul.f32 %v201, %v167
    %v315 = vmul.f32 %v205, %v168
    %v316 = vmul.f32 %v201, %v169
    %v317 = vmul.f32 %v205, %v170
    %v318 = vmul.f32 %v201, %v171
    %v319 = vmul.f32 %v205, %v172
    %v320 = vmul.f32 %v201, %v173
    %v321 = vmul.f32 %v205, %v174
    %v322 = vmul.f32 %v201, %v175
    %v323 = vmul.f32 %v205, %v176
    %v324 = vmul.f32 %v201, %v177
    %v325 = vmul.f32 %v205, %v178
    %v326 = vmul.f32 %v201, %v179
    %v327 = vmul.f32 %v205, %v180
    %v328 = vmul.f32 %v201, %v181
    %v329 = vmul.f32 %v205, %v182
    %v330 = vmul.f32 %v201, %v183
    %v331 = vmul.f32 %v205, %v184
    %v332 = vmul.f32 %v201, %v185
    %v333 = vmul.f32 %v205, %v186
    %v334 = vld [vmem:[#allocation4] sm:$0xff]
    %v335 = vld [vmem:[#allocation4 + $0x8] sm:$0xff]
    %v336 = vld [vmem:[#allocation4 + $0x10] sm:$0xff]
    %v337 = vld [vmem:[#allocation4 + $0x18] sm:$0xff]
    %v338 = vld [vmem:[#allocation4 + $0x20] sm:$0xff]
    %v339 = vld [vmem:[#allocation4 + $0x28] sm:$0xff]
    %v340 = vld [vmem:[#allocation4 + $0x30] sm:$0xff]
    %v341 = vld [vmem:[#allocation4 + $0x38] sm:$0xff]
    %v342 = vld [vmem:[#allocation4 + $0x40] sm:$0xff]
    %v343 = vld [vmem:[#allocation4 + $0x48] sm:$0xff]
    %v344 = vld [vmem:[#allocation4 + $0x50] sm:$0xff]
    %v345 = vld [vmem:[#allocation4 + $0x58] sm:$0xff]
    %v346 = vld [vmem:[#allocation4 + $0x60] sm:$0xff]
    %v347 = vld [vmem:[#allocation4 + $0x68] sm:$0xff]
    %v348 = vld [vmem:[#allocation4 + $0x70] sm:$0xff]
    %v349 = vld [vmem:[#allocation4 + $0x78] sm:$0xff]
    %v350 = vld [vmem:[#allocation4 + $0x80] sm:$0xff]
    %v351 = vld [vmem:[#allocation4 + $0x88] sm:$0xff]
    %v352 = vld [vmem:[#allocation4 + $0x90] sm:$0xff]
    %v353 = vld [vmem:[#allocation4 + $0x98] sm:$0xff]
    %v354 = vld [vmem:[#allocation4 + $0xa0] sm:$0xff]
    %v355 = vld [vmem:[#allocation4 + $0xa8] sm:$0xff]
    %v356 = vld [vmem:[#allocation4 + $0xb0] sm:$0xff]
    %v357 = vld [vmem:[#allocation4 + $0xb8] sm:$0xff]
    %v358 = vld [vmem:[#allocation4 + $0xc0] sm:$0xff]
    %v359 = vld [vmem:[#allocation4 + $0xc8] sm:$0xff]
    %v360 = vld [vmem:[#allocation4 + $0xd0] sm:$0xff]
    %v361 = vld [vmem:[#allocation4 + $0xd8] sm:$0xff]
    %v362 = vld [vmem:[#allocation4 + $0xe0] sm:$0xff]
    %v363 = vld [vmem:[#allocation4 + $0xe8] sm:$0xff]
    %v364 = vld [vmem:[#allocation4 + $0xf0] sm:$0xff]
    %v365 = vld [vmem:[#allocation4 + $0xf8] sm:$0xff]
    %v366 = vld [vmem:[#allocation4 + $0x100] sm:$0xff]
    %v367 = vld [vmem:[#allocation4 + $0x108] sm:$0xff]
    %v368 = vld [vmem:[#allocation4 + $0x110] sm:$0xff]
    %v369 = vld [vmem:[#allocation4 + $0x118] sm:$0xff]
    %v370 = vld [vmem:[#allocation4 + $0x120] sm:$0xff]
    %v371 = vld [vmem:[#allocation4 + $0x128] sm:$0xff]
    %v372 = vld [vmem:[#allocation4 + $0x130] sm:$0xff]
    %v373 = vld [vmem:[#allocation4 + $0x138] sm:$0xff]
    %v374 = vld [vmem:[#allocation4 + $0x140] sm:$0xff]
    %v375 = vld [vmem:[#allocation4 + $0x148] sm:$0xff]
    %v376 = vld [vmem:[#allocation4 + $0x150] sm:$0xff]
    %v377 = vld [vmem:[#allocation4 + $0x158] sm:$0xff]
    %v378 = vld [vmem:[#allocation4 + $0x160] sm:$0xff]
    %v379 = vld [vmem:[#allocation4 + $0x168] sm:$0xff]
    %v380 = vld [vmem:[#allocation4 + $0x170] sm:$0xff]
    %v381 = vld [vmem:[#allocation4 + $0x178] sm:$0xff]
    %v382 = vld [vmem:[#allocation4 + $0x180] sm:$0xff]
    %v383 = vld [vmem:[#allocation4 + $0x188] sm:$0xff]
    %v384 = vld [vmem:[#allocation4 + $0x190] sm:$0xff]
    %v385 = vld [vmem:[#allocation4 + $0x198] sm:$0xff]
    %v386 = vld [vmem:[#allocation4 + $0x1a0] sm:$0xff]
    %v387 = vld [vmem:[#allocation4 + $0x1a8] sm:$0xff]
    %v388 = vld [vmem:[#allocation4 + $0x1b0] sm:$0xff]
    %v389 = vld [vmem:[#allocation4 + $0x1b8] sm:$0xff]
    %v390 = vld [vmem:[#allocation4 + $0x1c0] sm:$0xff]
    %v391 = vld [vmem:[#allocation4 + $0x1c8] sm:$0xff]
    %v392 = vld [vmem:[#allocation4 + $0x1d0] sm:$0xff]
    %v393 = vld [vmem:[#allocation4 + $0x1d8] sm:$0xff]
    %v394 = vld [vmem:[#allocation4 + $0x1e0] sm:$0xff]
    %v395 = vld [vmem:[#allocation4 + $0x1e8] sm:$0xff]
    %v396 = vld [vmem:[#allocation4 + $0x1f0] sm:$0xff]
    %v397 = vld [vmem:[#allocation4 + $0x1f8] sm:$0xff]
    %v398 = vld [vmem:[#allocation4 + $0x200] sm:$0xff]
    %v399 = vld [vmem:[#allocation4 + $0x208] sm:$0xff]
    %v400 = vld [vmem:[#allocation4 + $0x210] sm:$0xff]
    %v401 = vld [vmem:[#allocation4 + $0x218] sm:$0xff]
    %v402 = vld [vmem:[#allocation4 + $0x220] sm:$0xff]
    %v403 = vld [vmem:[#allocation4 + $0x228] sm:$0xff]
    %v404 = vld [vmem:[#allocation4 + $0x230] sm:$0xff]
    %v405 = vld [vmem:[#allocation4 + $0x238] sm:$0xff]
    %v406 = vld [vmem:[#allocation4 + $0x240] sm:$0xff]
    %v407 = vld [vmem:[#allocation4 + $0x248] sm:$0xff]
    %v408 = vld [vmem:[#allocation4 + $0x250] sm:$0xff]
    %v409 = vld [vmem:[#allocation4 + $0x258] sm:$0xff]
    %v410 = vld [vmem:[#allocation4 + $0x260] sm:$0xff]
    %v411 = vld [vmem:[#allocation4 + $0x268] sm:$0xff]
    %v412 = vld [vmem:[#allocation4 + $0x270] sm:$0xff]
    %v413 = vld [vmem:[#allocation4 + $0x278] sm:$0xff]
    %v414 = vld [vmem:[#allocation4 + $0x280] sm:$0xff]
    %v415 = vld [vmem:[#allocation4 + $0x288] sm:$0xff]
    %v416 = vld [vmem:[#allocation4 + $0x290] sm:$0xff]
    %v417 = vld [vmem:[#allocation4 + $0x298] sm:$0xff]
    %v418 = vld [vmem:[#allocation4 + $0x2a0] sm:$0xff]
    %v419 = vld [vmem:[#allocation4 + $0x2a8] sm:$0xff]
    %v420 = vld [vmem:[#allocation4 + $0x2b0] sm:$0xff]
    %v421 = vld [vmem:[#allocation4 + $0x2b8] sm:$0xff]
    %v422 = vld [vmem:[#allocation4 + $0x2c0] sm:$0xff]
    %v423 = vld [vmem:[#allocation4 + $0x2c8] sm:$0xff]
    %v424 = vld [vmem:[#allocation4 + $0x2d0] sm:$0xff]
    %v425 = vld [vmem:[#allocation4 + $0x2d8] sm:$0xff]
    %v426 = vld [vmem:[#allocation4 + $0x2e0] sm:$0xff]
    %v427 = vld [vmem:[#allocation4 + $0x2e8] sm:$0xff]
    %v428 = vld [vmem:[#allocation4 + $0x2f0] sm:$0xff]
    %v429 = vld [vmem:[#allocation4 + $0x2f8] sm:$0xff]
    %v430 = vld [vmem:[#allocation4 + $0x300] sm:$0xff]
    %v431 = vld [vmem:[#allocation4 + $0x308] sm:$0xff]
    %v432 = vld [vmem:[#allocation4 + $0x310] sm:$0xff]
    %v433 = vld [vmem:[#allocation4 + $0x318] sm:$0xff]
    %v434 = vld [vmem:[#allocation4 + $0x320] sm:$0xff]
    %v435 = vld [vmem:[#allocation4 + $0x328] sm:$0xff]
    %v436 = vld [vmem:[#allocation4 + $0x330] sm:$0xff]
    %v437 = vld [vmem:[#allocation4 + $0x338] sm:$0xff]
    %v438 = vld [vmem:[#allocation4 + $0x340] sm:$0xff]
    %v439 = vld [vmem:[#allocation4 + $0x348] sm:$0xff]
    %v440 = vld [vmem:[#allocation4 + $0x350] sm:$0xff]
    %v441 = vld [vmem:[#allocation4 + $0x358] sm:$0xff]
    %v442 = vld [vmem:[#allocation4 + $0x360] sm:$0xff]
    %v443 = vld [vmem:[#allocation4 + $0x368] sm:$0xff]
    %v444 = vld [vmem:[#allocation4 + $0x370] sm:$0xff]
    %v445 = vld [vmem:[#allocation4 + $0x378] sm:$0xff]
    %v446 = vld [vmem:[#allocation4 + $0x380] sm:$0xff]
    %v447 = vld [vmem:[#allocation4 + $0x388] sm:$0xff]
    %v448 = vld [vmem:[#allocation4 + $0x390] sm:$0xff]
    %v449 = vld [vmem:[#allocation4 + $0x398] sm:$0xff]
    %v450 = vld [vmem:[#allocation4 + $0x3a0] sm:$0xff]
    %v451 = vld [vmem:[#allocation4 + $0x3a8] sm:$0xff]
    %v452 = vld [vmem:[#allocation4 + $0x3b0] sm:$0xff]
    %v453 = vld [vmem:[#allocation4 + $0x3b8] sm:$0xff]
    %v454 = vld [vmem:[#allocation4 + $0x3c0] sm:$0xff]
    %v455 = vld [vmem:[#allocation4 + $0x3c8] sm:$0xff]
    %v456 = vld [vmem:[#allocation4 + $0x3d0] sm:$0xff]
    %v457 = vld [vmem:[#allocation4 + $0x3d8] sm:$0xff]
    %v458 = vld [vmem:[#allocation4 + $0x3e0] sm:$0xff]
    %v459 = vld [vmem:[#allocation4 + $0x3e8] sm:$0xff]
    %v460 = vld [vmem:[#allocation4 + $0x3f0] sm:$0xff]
    %v461 = vld [vmem:[#allocation4 + $0x3f8] sm:$0xff]
    %v462 = vlaneseq
    %v463 = vshrl.u32 %v462, 7
    %v464 = vsub.s32 1, %v463
    %v465 = vrot.slane %v58, %v464
    %v466 = vlaneseq
    %v467 = vshrl.u32 %v466, 7
    %v468 = vsub.s32 5, %v467
    %v469 = vrot.slane %v58, %v468
    %v472 = vlaneseq
    %v473 = vshrl.u32 %v472, 7
    %v474 = vsub.s32 1, %v473
    %v475 = vrot.slane %v465, %v474
    %v476 = vlaneseq
    %v477 = vshrl.u32 %v476, 7
    %v478 = vsub.s32 1, %v477
    %v479 = vrot.slane %v469, %v478
    %v480 = vmul.f32 %v475, %v334
    %v481 = vmul.f32 %v479, %v335
    %v482 = vmul.f32 %v475, %v336
    %v483 = vmul.f32 %v479, %v337
    %v484 = vmul.f32 %v475, %v338
    %v485 = vmul.f32 %v479, %v339
    %v486 = vmul.f32 %v475, %v340
    %v487 = vmul.f32 %v479, %v341
    %v488 = vmul.f32 %v475, %v342
    %v489 = vmul.f32 %v479, %v343
    %v490 = vmul.f32 %v475, %v344
    %v491 = vmul.f32 %v479, %v345
    %v492 = vmul.f32 %v475, %v346
    %v493 = vmul.f32 %v479, %v347
    %v494 = vmul.f32 %v475, %v348
    %v495 = vmul.f32 %v479, %v349
    %v496 = vmul.f32 %v475, %v350
    %v497 = vmul.f32 %v479, %v351
    %v498 = vmul.f32 %v475, %v352
    %v499 = vmul.f32 %v479, %v353
    %v500 = vmul.f32 %v475, %v354
    %v501 = vmul.f32 %v479, %v355
    %v502 = vmul.f32 %v475, %v356
    %v503 = vmul.f32 %v479, %v357
    %v504 = vmul.f32 %v475, %v358
    %v505 = vmul.f32 %v479, %v359
    %v506 = vmul.f32 %v475, %v360
    %v507 = vmul.f32 %v479, %v361
    %v508 = vmul.f32 %v475, %v362
    %v509 = vmul.f32 %v479, %v363
    %v510 = vmul.f32 %v475, %v364
    %v511 = vmul.f32 %v479, %v365
    %v512 = vmul.f32 %v475, %v366
    %v513 = vmul.f32 %v479, %v367
    %v514 = vmul.f32 %v475, %v368
    %v515 = vmul.f32 %v479, %v369
    %v516 = vmul.f32 %v475, %v370
    %v517 = vmul.f32 %v479, %v371
    %v518 = vmul.f32 %v475, %v372
    %v519 = vmul.f32 %v479, %v373
    %v520 = vmul.f32 %v475, %v374
    %v521 = vmul.f32 %v479, %v375
    %v522 = vmul.f32 %v475, %v376
    %v523 = vmul.f32 %v479, %v377
    %v524 = vmul.f32 %v475, %v378
    %v525 = vmul.f32 %v479, %v379
    %v526 = vmul.f32 %v475, %v380
    %v527 = vmul.f32 %v479, %v381
    %v528 = vmul.f32 %v475, %v382
    %v529 = vmul.f32 %v479, %v383
    %v530 = vmul.f32 %v475, %v384
    %v531 = vmul.f32 %v479, %v385
    %v532 = vmul.f32 %v475, %v386
    %v533 = vmul.f32 %v479, %v387
    %v534 = vmul.f32 %v475, %v388
    %v535 = vmul.f32 %v479, %v389
    %v536 = vmul.f32 %v475, %v390
    %v537 = vmul.f32 %v479, %v391
    %v538 = vmul.f32 %v475, %v392
    %v539 = vmul.f32 %v479, %v393
    %v540 = vmul.f32 %v475, %v394
    %v541 = vmul.f32 %v479, %v395
    %v542 = vmul.f32 %v475, %v396
    %v543 = vmul.f32 %v479, %v397
    %v544 = vmul.f32 %v475, %v398
    %v545 = vmul.f32 %v479, %v399
    %v546 = vmul.f32 %v475, %v400
    %v547 = vmul.f32 %v479, %v401
    %v548 = vmul.f32 %v475, %v402
    %v549 = vmul.f32 %v479, %v403
    %v550 = vmul.f32 %v475, %v404
    %v551 = vmul.f32 %v479, %v405
    %v552 = vmul.f32 %v475, %v406
    %v553 = vmul.f32 %v479, %v407
    %v554 = vmul.f32 %v475, %v408
    %v555 = vmul.f32 %v479, %v409
    %v556 = vmul.f32 %v475, %v410
    %v557 = vmul.f32 %v479, %v411
    %v558 = vmul.f32 %v475, %v412
    %v559 = vmul.f32 %v479, %v413
    %v560 = vmul.f32 %v475, %v414
    %v561 = vmul.f32 %v479, %v415
    %v562 = vmul.f32 %v475, %v416
    %v563 = vmul.f32 %v479, %v417
    %v564 = vmul.f32 %v475, %v418
    %v565 = vmul.f32 %v479, %v419
    %v566 = vmul.f32 %v475, %v420
    %v567 = vmul.f32 %v479, %v421
    %v568 = vmul.f32 %v475, %v422
    %v569 = vmul.f32 %v479, %v423
    %v570 = vmul.f32 %v475, %v424
    %v571 = vmul.f32 %v479, %v425
    %v572 = vmul.f32 %v475, %v426
    %v573 = vmul.f32 %v479, %v427
    %v574 = vmul.f32 %v475, %v428
    %v575 = vmul.f32 %v479, %v429
    %v576 = vmul.f32 %v475, %v430
    %v577 = vmul.f32 %v479, %v431
    %v578 = vmul.f32 %v475, %v432
    %v579 = vmul.f32 %v479, %v433
    %v580 = vmul.f32 %v475, %v434
    %v581 = vmul.f32 %v479, %v435
    %v582 = vmul.f32 %v475, %v436
    %v583 = vmul.f32 %v479, %v437
    %v584 = vmul.f32 %v475, %v438
    %v585 = vmul.f32 %v479, %v439
    %v586 = vmul.f32 %v475, %v440
    %v587 = vmul.f32 %v479, %v441
    %v588 = vmul.f32 %v475, %v442
    %v589 = vmul.f32 %v479, %v443
    %v590 = vmul.f32 %v475, %v444
    %v591 = vmul.f32 %v479, %v445
    %v592 = vmul.f32 %v475, %v446
    %v593 = vmul.f32 %v479, %v447
    %v594 = vmul.f32 %v475, %v448
    %v595 = vmul.f32 %v479, %v449
    %v596 = vmul.f32 %v475, %v450
    %v597 = vmul.f32 %v479, %v451
    %v598 = vmul.f32 %v475, %v452
    %v599 = vmul.f32 %v479, %v453
    %v600 = vmul.f32 %v475, %v454
    %v601 = vmul.f32 %v479, %v455
    %v602 = vmul.f32 %v475, %v456
    %v603 = vmul.f32 %v479, %v457
    %v604 = vmul.f32 %v475, %v458
    %v605 = vmul.f32 %v479, %v459
    %v606 = vmul.f32 %v475, %v460
    %v607 = vmul.f32 %v479, %v461
    %v608 = vadd.f32 %v206, %v480
    %v609 = vadd.f32 %v207, %v481
    %v610 = vadd.f32 %v208, %v482
    %v611 = vadd.f32 %v209, %v483
    %v612 = vadd.f32 %v210, %v484
    %v613 = vadd.f32 %v211, %v485
    %v614 = vadd.f32 %v212, %v486
    %v615 = vadd.f32 %v213, %v487
    %v616 = vadd.f32 %v214, %v488
    %v617 = vadd.f32 %v215, %v489
    %v618 = vadd.f32 %v216, %v490
    %v619 = vadd.f32 %v217, %v491
    %v620 = vadd.f32 %v218, %v492
    %v621 = vadd.f32 %v219, %v493
    %v622 = vadd.f32 %v220, %v494
    %v623 = vadd.f32 %v221, %v495
    %v624 = vadd.f32 %v222, %v496
    %v625 = vadd.f32 %v223, %v497
    %v626 = vadd.f32 %v224, %v498
    %v627 = vadd.f32 %v225, %v499
    %v628 = vadd.f32 %v226, %v500
    %v629 = vadd.f32 %v227, %v501
    %v630 = vadd.f32 %v228, %v502
    %v631 = vadd.f32 %v229, %v503
    %v632 = vadd.f32 %v230, %v504
    %v633 = vadd.f32 %v231, %v505
    %v634 = vadd.f32 %v232, %v506
    %v635 = vadd.f32 %v233, %v507
    %v636 = vadd.f32 %v234, %v508
    %v637 = vadd.f32 %v235, %v509
    %v638 = vadd.f32 %v236, %v510
    %v639 = vadd.f32 %v237, %v511
    %v640 = vadd.f32 %v238, %v512
    %v641 = vadd.f32 %v239, %v513
    %v642 = vadd.f32 %v240, %v514
    %v643 = vadd.f32 %v241, %v515
    %v644 = vadd.f32 %v242, %v516
    %v645 = vadd.f32 %v243, %v517
    %v646 = vadd.f32 %v244, %v518
    %v647 = vadd.f32 %v245, %v519
    %v648 = vadd.f32 %v246, %v520
    %v649 = vadd.f32 %v247, %v521
    %v650 = vadd.f32 %v248, %v522
    %v651 = vadd.f32 %v249, %v523
    %v652 = vadd.f32 %v250, %v524
    %v653 = vadd.f32 %v251, %v525
    %v654 = vadd.f32 %v252, %v526
    %v655 = vadd.f32 %v253, %v527
    %v656 = vadd.f32 %v254, %v528
    %v657 = vadd.f32 %v255, %v529
    %v658 = vadd.f32 %v256, %v530
    %v659 = vadd.f32 %v257, %v531
    %v660 = vadd.f32 %v258, %v532
    %v661 = vadd.f32 %v259, %v533
    %v662 = vadd.f32 %v260, %v534
    %v663 = vadd.f32 %v261, %v535
    %v664 = vadd.f32 %v262, %v536
    %v665 = vadd.f32 %v263, %v537
    %v666 = vadd.f32 %v264, %v538
    %v667 = vadd.f32 %v265, %v539
    %v668 = vadd.f32 %v266, %v540
    %v669 = vadd.f32 %v267, %v541
    %v670 = vadd.f32 %v268, %v542
    %v671 = vadd.f32 %v269, %v543
    %v672 = vadd.f32 %v270, %v544
    %v673 = vadd.f32 %v271, %v545
    %v674 = vadd.f32 %v272, %v546
    %v675 = vadd.f32 %v273, %v547
    %v676 = vadd.f32 %v274, %v548
    %v677 = vadd.f32 %v275, %v549
    %v678 = vadd.f32 %v276, %v550
    %v679 = vadd.f32 %v277, %v551
    %v680 = vadd.f32 %v278, %v552
    %v681 = vadd.f32 %v279, %v553
    %v682 = vadd.f32 %v280, %v554
    %v683 = vadd.f32 %v281, %v555
    %v684 = vadd.f32 %v282, %v556
    %v685 = vadd.f32 %v283, %v557
    %v686 = vadd.f32 %v284, %v558
    %v687 = vadd.f32 %v285, %v559
    %v688 = vadd.f32 %v286, %v560
    %v689 = vadd.f32 %v287, %v561
    %v690 = vadd.f32 %v288, %v562
    %v691 = vadd.f32 %v289, %v563
    %v692 = vadd.f32 %v290, %v564
    %v693 = vadd.f32 %v291, %v565
    %v694 = vadd.f32 %v292, %v566
    %v695 = vadd.f32 %v293, %v567
    %v696 = vadd.f32 %v294, %v568
    %v697 = vadd.f32 %v295, %v569
    %v698 = vadd.f32 %v296, %v570
    %v699 = vadd.f32 %v297, %v571
    %v700 = vadd.f32 %v298, %v572
    %v701 = vadd.f32 %v299, %v573
    %v702 = vadd.f32 %v300, %v574
    %v703 = vadd.f32 %v301, %v575
    %v704 = vadd.f32 %v302, %v576
    %v705 = vadd.f32 %v303, %v577
    %v706 = vadd.f32 %v304, %v578
    %v707 = vadd.f32 %v305, %v579
    %v708 = vadd.f32 %v306, %v580
    %v709 = vadd.f32 %v307, %v581
    %v710 = vadd.f32 %v308, %v582
    %v711 = vadd.f32 %v309, %v583
    %v712 = vadd.f32 %v310, %v584
    %v713 = vadd.f32 %v311, %v585
    %v714 = vadd.f32 %v312, %v586
    %v715 = vadd.f32 %v313, %v587
    %v716 = vadd.f32 %v314, %v588
    %v717 = vadd.f32 %v315, %v589
    %v718 = vadd.f32 %v316, %v590
    %v719 = vadd.f32 %v317, %v591
    %v720 = vadd.f32 %v318, %v592
    %v721 = vadd.f32 %v319, %v593
    %v722 = vadd.f32 %v320, %v594
    %v723 = vadd.f32 %v321, %v595
    %v724 = vadd.f32 %v322, %v596
    %v725 = vadd.f32 %v323, %v597
    %v726 = vadd.f32 %v324, %v598
    %v727 = vadd.f32 %v325, %v599
    %v728 = vadd.f32 %v326, %v600
    %v729 = vadd.f32 %v327, %v601
    %v730 = vadd.f32 %v328, %v602
    %v731 = vadd.f32 %v329, %v603
    %v732 = vadd.f32 %v330, %v604
    %v733 = vadd.f32 %v331, %v605
    %v734 = vadd.f32 %v332, %v606
    %v735 = vadd.f32 %v333, %v607
    %v736 = vld [vmem:[#allocation6] sm:$0xff]
    %v737 = vld [vmem:[#allocation6 + $0x8] sm:$0xff]
    %v738 = vld [vmem:[#allocation6 + $0x10] sm:$0xff]
    %v739 = vld [vmem:[#allocation6 + $0x18] sm:$0xff]
    %v740 = vld [vmem:[#allocation6 + $0x20] sm:$0xff]
    %v741 = vld [vmem:[#allocation6 + $0x28] sm:$0xff]
    %v742 = vld [vmem:[#allocation6 + $0x30] sm:$0xff]
    %v743 = vld [vmem:[#allocation6 + $0x38] sm:$0xff]
    %v744 = vld [vmem:[#allocation6 + $0x40] sm:$0xff]
    %v745 = vld [vmem:[#allocation6 + $0x48] sm:$0xff]
    %v746 = vld [vmem:[#allocation6 + $0x50] sm:$0xff]
    %v747 = vld [vmem:[#allocation6 + $0x58] sm:$0xff]
    %v748 = vld [vmem:[#allocation6 + $0x60] sm:$0xff]
    %v749 = vld [vmem:[#allocation6 + $0x68] sm:$0xff]
    %v750 = vld [vmem:[#allocation6 + $0x70] sm:$0xff]
    %v751 = vld [vmem:[#allocation6 + $0x78] sm:$0xff]
    %v752 = vld [vmem:[#allocation6 + $0x80] sm:$0xff]
    %v753 = vld [vmem:[#allocation6 + $0x88] sm:$0xff]
    %v754 = vld [vmem:[#allocation6 + $0x90] sm:$0xff]
    %v755 = vld [vmem:[#allocation6 + $0x98] sm:$0xff]
    %v756 = vld [vmem:[#allocation6 + $0xa0] sm:$0xff]
    %v757 = vld [vmem:[#allocation6 + $0xa8] sm:$0xff]
    %v758 = vld [vmem:[#allocation6 + $0xb0] sm:$0xff]
    %v759 = vld [vmem:[#allocation6 + $0xb8] sm:$0xff]
    %v760 = vld [vmem:[#allocation6 + $0xc0] sm:$0xff]
    %v761 = vld [vmem:[#allocation6 + $0xc8] sm:$0xff]
    %v762 = vld [vmem:[#allocation6 + $0xd0] sm:$0xff]
    %v763 = vld [vmem:[#allocation6 + $0xd8] sm:$0xff]
    %v764 = vld [vmem:[#allocation6 + $0xe0] sm:$0xff]
    %v765 = vld [vmem:[#allocation6 + $0xe8] sm:$0xff]
    %v766 = vld [vmem:[#allocation6 + $0xf0] sm:$0xff]
    %v767 = vld [vmem:[#allocation6 + $0xf8] sm:$0xff]
    %v768 = vld [vmem:[#allocation6 + $0x100] sm:$0xff]
    %v769 = vld [vmem:[#allocation6 + $0x108] sm:$0xff]
    %v770 = vld [vmem:[#allocation6 + $0x110] sm:$0xff]
    %v771 = vld [vmem:[#allocation6 + $0x118] sm:$0xff]
    %v772 = vld [vmem:[#allocation6 + $0x120] sm:$0xff]
    %v773 = vld [vmem:[#allocation6 + $0x128] sm:$0xff]
    %v774 = vld [vmem:[#allocation6 + $0x130] sm:$0xff]
    %v775 = vld [vmem:[#allocation6 + $0x138] sm:$0xff]
    %v776 = vld [vmem:[#allocation6 + $0x140] sm:$0xff]
    %v777 = vld [vmem:[#allocation6 + $0x148] sm:$0xff]
    %v778 = vld [vmem:[#allocation6 + $0x150] sm:$0xff]
    %v779 = vld [vmem:[#allocation6 + $0x158] sm:$0xff]
    %v780 = vld [vmem:[#allocation6 + $0x160] sm:$0xff]
    %v781 = vld [vmem:[#allocation6 + $0x168] sm:$0xff]
    %v782 = vld [vmem:[#allocation6 + $0x170] sm:$0xff]
    %v783 = vld [vmem:[#allocation6 + $0x178] sm:$0xff]
    %v784 = vld [vmem:[#allocation6 + $0x180] sm:$0xff]
    %v785 = vld [vmem:[#allocation6 + $0x188] sm:$0xff]
    %v786 = vld [vmem:[#allocation6 + $0x190] sm:$0xff]
    %v787 = vld [vmem:[#allocation6 + $0x198] sm:$0xff]
    %v788 = vld [vmem:[#allocation6 + $0x1a0] sm:$0xff]
    %v789 = vld [vmem:[#allocation6 + $0x1a8] sm:$0xff]
    %v790 = vld [vmem:[#allocation6 + $0x1b0] sm:$0xff]
    %v791 = vld [vmem:[#allocation6 + $0x1b8] sm:$0xff]
    %v792 = vld [vmem:[#allocation6 + $0x1c0] sm:$0xff]
    %v793 = vld [vmem:[#allocation6 + $0x1c8] sm:$0xff]
    %v794 = vld [vmem:[#allocation6 + $0x1d0] sm:$0xff]
    %v795 = vld [vmem:[#allocation6 + $0x1d8] sm:$0xff]
    %v796 = vld [vmem:[#allocation6 + $0x1e0] sm:$0xff]
    %v797 = vld [vmem:[#allocation6 + $0x1e8] sm:$0xff]
    %v798 = vld [vmem:[#allocation6 + $0x1f0] sm:$0xff]
    %v799 = vld [vmem:[#allocation6 + $0x1f8] sm:$0xff]
    %v800 = vld [vmem:[#allocation6 + $0x200] sm:$0xff]
    %v801 = vld [vmem:[#allocation6 + $0x208] sm:$0xff]
    %v802 = vld [vmem:[#allocation6 + $0x210] sm:$0xff]
    %v803 = vld [vmem:[#allocation6 + $0x218] sm:$0xff]
    %v804 = vld [vmem:[#allocation6 + $0x220] sm:$0xff]
    %v805 = vld [vmem:[#allocation6 + $0x228] sm:$0xff]
    %v806 = vld [vmem:[#allocation6 + $0x230] sm:$0xff]
    %v807 = vld [vmem:[#allocation6 + $0x238] sm:$0xff]
    %v808 = vld [vmem:[#allocation6 + $0x240] sm:$0xff]
    %v809 = vld [vmem:[#allocation6 + $0x248] sm:$0xff]
    %v810 = vld [vmem:[#allocation6 + $0x250] sm:$0xff]
    %v811 = vld [vmem:[#allocation6 + $0x258] sm:$0xff]
    %v812 = vld [vmem:[#allocation6 + $0x260] sm:$0xff]
    %v813 = vld [vmem:[#allocation6 + $0x268] sm:$0xff]
    %v814 = vld [vmem:[#allocation6 + $0x270] sm:$0xff]
    %v815 = vld [vmem:[#allocation6 + $0x278] sm:$0xff]
    %v816 = vld [vmem:[#allocation6 + $0x280] sm:$0xff]
    %v817 = vld [vmem:[#allocation6 + $0x288] sm:$0xff]
    %v818 = vld [vmem:[#allocation6 + $0x290] sm:$0xff]
    %v819 = vld [vmem:[#allocation6 + $0x298] sm:$0xff]
    %v820 = vld [vmem:[#allocation6 + $0x2a0] sm:$0xff]
    %v821 = vld [vmem:[#allocation6 + $0x2a8] sm:$0xff]
    %v822 = vld [vmem:[#allocation6 + $0x2b0] sm:$0xff]
    %v823 = vld [vmem:[#allocation6 + $0x2b8] sm:$0xff]
    %v824 = vld [vmem:[#allocation6 + $0x2c0] sm:$0xff]
    %v825 = vld [vmem:[#allocation6 + $0x2c8] sm:$0xff]
    %v826 = vld [vmem:[#allocation6 + $0x2d0] sm:$0xff]
    %v827 = vld [vmem:[#allocation6 + $0x2d8] sm:$0xff]
    %v828 = vld [vmem:[#allocation6 + $0x2e0] sm:$0xff]
    %v829 = vld [vmem:[#allocation6 + $0x2e8] sm:$0xff]
    %v830 = vld [vmem:[#allocation6 + $0x2f0] sm:$0xff]
    %v831 = vld [vmem:[#allocation6 + $0x2f8] sm:$0xff]
    %v832 = vld [vmem:[#allocation6 + $0x300] sm:$0xff]
    %v833 = vld [vmem:[#allocation6 + $0x308] sm:$0xff]
    %v834 = vld [vmem:[#allocation6 + $0x310] sm:$0xff]
    %v835 = vld [vmem:[#allocation6 + $0x318] sm:$0xff]
    %v836 = vld [vmem:[#allocation6 + $0x320] sm:$0xff]
    %v837 = vld [vmem:[#allocation6 + $0x328] sm:$0xff]
    %v838 = vld [vmem:[#allocation6 + $0x330] sm:$0xff]
    %v839 = vld [vmem:[#allocation6 + $0x338] sm:$0xff]
    %v840 = vld [vmem:[#allocation6 + $0x340] sm:$0xff]
    %v841 = vld [vmem:[#allocation6 + $0x348] sm:$0xff]
    %v842 = vld [vmem:[#allocation6 + $0x350] sm:$0xff]
    %v843 = vld [vmem:[#allocation6 + $0x358] sm:$0xff]
    %v844 = vld [vmem:[#allocation6 + $0x360] sm:$0xff]
    %v845 = vld [vmem:[#allocation6 + $0x368] sm:$0xff]
    %v846 = vld [vmem:[#allocation6 + $0x370] sm:$0xff]
    %v847 = vld [vmem:[#allocation6 + $0x378] sm:$0xff]
    %v848 = vld [vmem:[#allocation6 + $0x380] sm:$0xff]
    %v849 = vld [vmem:[#allocation6 + $0x388] sm:$0xff]
    %v850 = vld [vmem:[#allocation6 + $0x390] sm:$0xff]
    %v851 = vld [vmem:[#allocation6 + $0x398] sm:$0xff]
    %v852 = vld [vmem:[#allocation6 + $0x3a0] sm:$0xff]
    %v853 = vld [vmem:[#allocation6 + $0x3a8] sm:$0xff]
    %v854 = vld [vmem:[#allocation6 + $0x3b0] sm:$0xff]
    %v855 = vld [vmem:[#allocation6 + $0x3b8] sm:$0xff]
    %v856 = vld [vmem:[#allocation6 + $0x3c0] sm:$0xff]
    %v857 = vld [vmem:[#allocation6 + $0x3c8] sm:$0xff]
    %v858 = vld [vmem:[#allocation6 + $0x3d0] sm:$0xff]
    %v859 = vld [vmem:[#allocation6 + $0x3d8] sm:$0xff]
    %v860 = vld [vmem:[#allocation6 + $0x3e0] sm:$0xff]
    %v861 = vld [vmem:[#allocation6 + $0x3e8] sm:$0xff]
    %v862 = vld [vmem:[#allocation6 + $0x3f0] sm:$0xff]
    %v863 = vld [vmem:[#allocation6 + $0x3f8] sm:$0xff]
    %v864 = vlaneseq
    %v865 = vshrl.u32 %v864, 7
    %v866 = vsub.s32 2, %v865
    %v867 = vrot.slane %v58, %v866
    %v868 = vlaneseq
    %v869 = vshrl.u32 %v868, 7
    %v870 = vsub.s32 6, %v869
    %v871 = vrot.slane %v58, %v870
    %v874 = vlaneseq
    %v875 = vshrl.u32 %v874, 7
    %v876 = vsub.s32 2, %v875
    %v877 = vrot.slane %v867, %v876
    %v878 = vlaneseq
    %v879 = vshrl.u32 %v878, 7
    %v880 = vsub.s32 2, %v879
    %v881 = vrot.slane %v871, %v880
    %v882 = vmul.f32 %v877, %v736
    %v883 = vmul.f32 %v881, %v737
    %v884 = vmul.f32 %v877, %v738
    %v885 = vmul.f32 %v881, %v739
    %v886 = vmul.f32 %v877, %v740
    %v887 = vmul.f32 %v881, %v741
    %v888 = vmul.f32 %v877, %v742
    %v889 = vmul.f32 %v881, %v743
    %v890 = vmul.f32 %v877, %v744
    %v891 = vmul.f32 %v881, %v745
    %v892 = vmul.f32 %v877, %v746
    %v893 = vmul.f32 %v881, %v747
    %v894 = vmul.f32 %v877, %v748
    %v895 = vmul.f32 %v881, %v749
    %v896 = vmul.f32 %v877, %v750
    %v897 = vmul.f32 %v881, %v751
    %v898 = vmul.f32 %v877, %v752
    %v899 = vmul.f32 %v881, %v753
    %v900 = vmul.f32 %v877, %v754
    %v901 = vmul.f32 %v881, %v755
    %v902 = vmul.f32 %v877, %v756
    %v903 = vmul.f32 %v881, %v757
    %v904 = vmul.f32 %v877, %v758
    %v905 = vmul.f32 %v881, %v759
    %v906 = vmul.f32 %v877, %v760
    %v907 = vmul.f32 %v881, %v761
    %v908 = vmul.f32 %v877, %v762
    %v909 = vmul.f32 %v881, %v763
    %v910 = vmul.f32 %v877, %v764
    %v911 = vmul.f32 %v881, %v765
    %v912 = vmul.f32 %v877, %v766
    %v913 = vmul.f32 %v881, %v767
    %v914 = vmul.f32 %v877, %v768
    %v915 = vmul.f32 %v881, %v769
    %v916 = vmul.f32 %v877, %v770
    %v917 = vmul.f32 %v881, %v771
    %v918 = vmul.f32 %v877, %v772
    %v919 = vmul.f32 %v881, %v773
    %v920 = vmul.f32 %v877, %v774
    %v921 = vmul.f32 %v881, %v775
    %v922 = vmul.f32 %v877, %v776
    %v923 = vmul.f32 %v881, %v777
    %v924 = vmul.f32 %v877, %v778
    %v925 = vmul.f32 %v881, %v779
    %v926 = vmul.f32 %v877, %v780
    %v927 = vmul.f32 %v881, %v781
    %v928 = vmul.f32 %v877, %v782
    %v929 = vmul.f32 %v881, %v783
    %v930 = vmul.f32 %v877, %v784
    %v931 = vmul.f32 %v881, %v785
    %v932 = vmul.f32 %v877, %v786
    %v933 = vmul.f32 %v881, %v787
    %v934 = vmul.f32 %v877, %v788
    %v935 = vmul.f32 %v881, %v789
    %v936 = vmul.f32 %v877, %v790
    %v937 = vmul.f32 %v881, %v791
    %v938 = vmul.f32 %v877, %v792
    %v939 = vmul.f32 %v881, %v793
    %v940 = vmul.f32 %v877, %v794
    %v941 = vmul.f32 %v881, %v795
    %v942 = vmul.f32 %v877, %v796
    %v943 = vmul.f32 %v881, %v797
    %v944 = vmul.f32 %v877, %v798
    %v945 = vmul.f32 %v881, %v799
    %v946 = vmul.f32 %v877, %v800
    %v947 = vmul.f32 %v881, %v801
    %v948 = vmul.f32 %v877, %v802
    %v949 = vmul.f32 %v881, %v803
    %v950 = vmul.f32 %v877, %v804
    %v951 = vmul.f32 %v881, %v805
    %v952 = vmul.f32 %v877, %v806
    %v953 = vmul.f32 %v881, %v807
    %v954 = vmul.f32 %v877, %v808
    %v955 = vmul.f32 %v881, %v809
    %v956 = vmul.f32 %v877, %v810
    %v957 = vmul.f32 %v881, %v811
    %v958 = vmul.f32 %v877, %v812
    %v959 = vmul.f32 %v881, %v813
    %v960 = vmul.f32 %v877, %v814
    %v961 = vmul.f32 %v881, %v815
    %v962 = vmul.f32 %v877, %v816
    %v963 = vmul.f32 %v881, %v817
    %v964 = vmul.f32 %v877, %v818
    %v965 = vmul.f32 %v881, %v819
    %v966 = vmul.f32 %v877, %v820
    %v967 = vmul.f32 %v881, %v821
    %v968 = vmul.f32 %v877, %v822
    %v969 = vmul.f32 %v881, %v823
    %v970 = vmul.f32 %v877, %v824
    %v971 = vmul.f32 %v881, %v825
    %v972 = vmul.f32 %v877, %v826
    %v973 = vmul.f32 %v881, %v827
    %v974 = vmul.f32 %v877, %v828
    %v975 = vmul.f32 %v881, %v829
    %v976 = vmul.f32 %v877, %v830
    %v977 = vmul.f32 %v881, %v831
    %v978 = vmul.f32 %v877, %v832
    %v979 = vmul.f32 %v881, %v833
    %v980 = vmul.f32 %v877, %v834
    %v981 = vmul.f32 %v881, %v835
    %v982 = vmul.f32 %v877, %v836
    %v983 = vmul.f32 %v881, %v837
    %v984 = vmul.f32 %v877, %v838
    %v985 = vmul.f32 %v881, %v839
    %v986 = vmul.f32 %v877, %v840
    %v987 = vmul.f32 %v881, %v841
    %v988 = vmul.f32 %v877, %v842
    %v989 = vmul.f32 %v881, %v843
    %v990 = vmul.f32 %v877, %v844
    %v991 = vmul.f32 %v881, %v845
    %v992 = vmul.f32 %v877, %v846
    %v993 = vmul.f32 %v881, %v847
    %v994 = vmul.f32 %v877, %v848
    %v995 = vmul.f32 %v881, %v849
    %v996 = vmul.f32 %v877, %v850
    %v997 = vmul.f32 %v881, %v851
    %v998 = vmul.f32 %v877, %v852
    %v999 = vmul.f32 %v881, %v853
    %v1000 = vmul.f32 %v877, %v854
    %v1001 = vmul.f32 %v881, %v855
    %v1002 = vmul.f32 %v877, %v856
    %v1003 = vmul.f32 %v881, %v857
    %v1004 = vmul.f32 %v877, %v858
    %v1005 = vmul.f32 %v881, %v859
    %v1006 = vmul.f32 %v877, %v860
    %v1007 = vmul.f32 %v881, %v861
    %v1008 = vmul.f32 %v877, %v862
    %v1009 = vmul.f32 %v881, %v863
    %v1010 = vadd.f32 %v608, %v882
    %v1011 = vadd.f32 %v609, %v883
    %v1012 = vadd.f32 %v610, %v884
    %v1013 = vadd.f32 %v611, %v885
    %v1014 = vadd.f32 %v612, %v886
    %v1015 = vadd.f32 %v613, %v887
    %v1016 = vadd.f32 %v614, %v888
    %v1017 = vadd.f32 %v615, %v889
    %v1018 = vadd.f32 %v616, %v890
    %v1019 = vadd.f32 %v617, %v891
    %v1020 = vadd.f32 %v618, %v892
    %v1021 = vadd.f32 %v619, %v893
    %v1022 = vadd.f32 %v620, %v894
    %v1023 = vadd.f32 %v621, %v895
    %v1024 = vadd.f32 %v622, %v896
    %v1025 = vadd.f32 %v623, %v897
    %v1026 = vadd.f32 %v624, %v898
    %v1027 = vadd.f32 %v625, %v899
    %v1028 = vadd.f32 %v626, %v900
    %v1029 = vadd.f32 %v627, %v901
    %v1030 = vadd.f32 %v628, %v902
    %v1031 = vadd.f32 %v629, %v903
    %v1032 = vadd.f32 %v630, %v904
    %v1033 = vadd.f32 %v631, %v905
    %v1034 = vadd.f32 %v632, %v906
    %v1035 = vadd.f32 %v633, %v907
    %v1036 = vadd.f32 %v634, %v908
    %v1037 = vadd.f32 %v635, %v909
    %v1038 = vadd.f32 %v636, %v910
    %v1039 = vadd.f32 %v637, %v911
    %v1040 = vadd.f32 %v638, %v912
    %v1041 = vadd.f32 %v639, %v913
    %v1042 = vadd.f32 %v640, %v914
    %v1043 = vadd.f32 %v641, %v915
    %v1044 = vadd.f32 %v642, %v916
    %v1045 = vadd.f32 %v643, %v917
    %v1046 = vadd.f32 %v644, %v918
    %v1047 = vadd.f32 %v645, %v919
    %v1048 = vadd.f32 %v646, %v920
    %v1049 = vadd.f32 %v647, %v921
    %v1050 = vadd.f32 %v648, %v922
    %v1051 = vadd.f32 %v649, %v923
    %v1052 = vadd.f32 %v650, %v924
    %v1053 = vadd.f32 %v651, %v925
    %v1054 = vadd.f32 %v652, %v926
    %v1055 = vadd.f32 %v653, %v927
    %v1056 = vadd.f32 %v654, %v928
    %v1057 = vadd.f32 %v655, %v929
    %v1058 = vadd.f32 %v656, %v930
    %v1059 = vadd.f32 %v657, %v931
    %v1060 = vadd.f32 %v658, %v932
    %v1061 = vadd.f32 %v659, %v933
    %v1062 = vadd.f32 %v660, %v934
    %v1063 = vadd.f32 %v661, %v935
    %v1064 = vadd.f32 %v662, %v936
    %v1065 = vadd.f32 %v663, %v937
    %v1066 = vadd.f32 %v664, %v938
    %v1067 = vadd.f32 %v665, %v939
    %v1068 = vadd.f32 %v666, %v940
    %v1069 = vadd.f32 %v667, %v941
    %v1070 = vadd.f32 %v668, %v942
    %v1071 = vadd.f32 %v669, %v943
    %v1072 = vadd.f32 %v670, %v944
    %v1073 = vadd.f32 %v671, %v945
    %v1074 = vadd.f32 %v672, %v946
    %v1075 = vadd.f32 %v673, %v947
    %v1076 = vadd.f32 %v674, %v948
    %v1077 = vadd.f32 %v675, %v949
    %v1078 = vadd.f32 %v676, %v950
    %v1079 = vadd.f32 %v677, %v951
    %v1080 = vadd.f32 %v678, %v952
    %v1081 = vadd.f32 %v679, %v953
    %v1082 = vadd.f32 %v680, %v954
    %v1083 = vadd.f32 %v681, %v955
    %v1084 = vadd.f32 %v682, %v956
    %v1085 = vadd.f32 %v683, %v957
    %v1086 = vadd.f32 %v684, %v958
    %v1087 = vadd.f32 %v685, %v959
    %v1088 = vadd.f32 %v686, %v960
    %v1089 = vadd.f32 %v687, %v961
    %v1090 = vadd.f32 %v688, %v962
    %v1091 = vadd.f32 %v689, %v963
    %v1092 = vadd.f32 %v690, %v964
    %v1093 = vadd.f32 %v691, %v965
    %v1094 = vadd.f32 %v692, %v966
    %v1095 = vadd.f32 %v693, %v967
    %v1096 = vadd.f32 %v694, %v968
    %v1097 = vadd.f32 %v695, %v969
    %v1098 = vadd.f32 %v696, %v970
    %v1099 = vadd.f32 %v697, %v971
    %v1100 = vadd.f32 %v698, %v972
    %v1101 = vadd.f32 %v699, %v973
    %v1102 = vadd.f32 %v700, %v974
    %v1103 = vadd.f32 %v701, %v975
    %v1104 = vadd.f32 %v702, %v976
    %v1105 = vadd.f32 %v703, %v977
    %v1106 = vadd.f32 %v704, %v978
    %v1107 = vadd.f32 %v705, %v979
    %v1108 = vadd.f32 %v706, %v980
    %v1109 = vadd.f32 %v707, %v981
    %v1110 = vadd.f32 %v708, %v982
    %v1111 = vadd.f32 %v709, %v983
    %v1112 = vadd.f32 %v710, %v984
    %v1113 = vadd.f32 %v711, %v985
    %v1114 = vadd.f32 %v712, %v986
    %v1115 = vadd.f32 %v713, %v987
    %v1116 = vadd.f32 %v714, %v988
    %v1117 = vadd.f32 %v715, %v989
    %v1118 = vadd.f32 %v716, %v990
    %v1119 = vadd.f32 %v717, %v991
    %v1120 = vadd.f32 %v718, %v992
    %v1121 = vadd.f32 %v719, %v993
    %v1122 = vadd.f32 %v720, %v994
    %v1123 = vadd.f32 %v721, %v995
    %v1124 = vadd.f32 %v722, %v996
    %v1125 = vadd.f32 %v723, %v997
    %v1126 = vadd.f32 %v724, %v998
    %v1127 = vadd.f32 %v725, %v999
    %v1128 = vadd.f32 %v726, %v1000
    %v1129 = vadd.f32 %v727, %v1001
    %v1130 = vadd.f32 %v728, %v1002
    %v1131 = vadd.f32 %v729, %v1003
    %v1132 = vadd.f32 %v730, %v1004
    %v1133 = vadd.f32 %v731, %v1005
    %v1134 = vadd.f32 %v732, %v1006
    %v1135 = vadd.f32 %v733, %v1007
    %v1136 = vadd.f32 %v734, %v1008
    %v1137 = vadd.f32 %v735, %v1009
    %1138 = vst [vmem:[%s4] sm:$0xff] %v1010
    %1139 = vst [vmem:[%s4 + $0x8] sm:$0xff] %v1011
    %1140 = vst [vmem:[%s4 + $0x10] sm:$0xff] %v1012
    %1141 = vst [vmem:[%s4 + $0x18] sm:$0xff] %v1013
    %1142 = vst [vmem:[%s4 + $0x20] sm:$0xff] %v1014
    %1143 = vst [vmem:[%s4 + $0x28] sm:$0xff] %v1015
    %1144 = vst [vmem:[%s4 + $0x30] sm:$0xff] %v1016
    %1145 = vst [vmem:[%s4 + $0x38] sm:$0xff] %v1017
    %1146 = vst [vmem:[%s4 + $0x40] sm:$0xff] %v1018
    %1147 = vst [vmem:[%s4 + $0x48] sm:$0xff] %v1019
    %1148 = vst [vmem:[%s4 + $0x50] sm:$0xff] %v1020
    %1149 = vst [vmem:[%s4 + $0x58] sm:$0xff] %v1021
    %1150 = vst [vmem:[%s4 + $0x60] sm:$0xff] %v1022
    %1151 = vst [vmem:[%s4 + $0x68] sm:$0xff] %v1023
    %1152 = vst [vmem:[%s4 + $0x70] sm:$0xff] %v1024
    %1153 = vst [vmem:[%s4 + $0x78] sm:$0xff] %v1025
    %1154 = vst [vmem:[%s4 + $0x80] sm:$0xff] %v1026
    %1155 = vst [vmem:[%s4 + $0x88] sm:$0xff] %v1027
    %1156 = vst [vmem:[%s4 + $0x90] sm:$0xff] %v1028
    %1157 = vst [vmem:[%s4 + $0x98] sm:$0xff] %v1029
    %1158 = vst [vmem:[%s4 + $0xa0] sm:$0xff] %v1030
    %1159 = vst [vmem:[%s4 + $0xa8] sm:$0xff] %v1031
    %1160 = vst [vmem:[%s4 + $0xb0] sm:$0xff] %v1032
    %1161 = vst [vmem:[%s4 + $0xb8] sm:$0xff] %v1033
    %1162 = vst [vmem:[%s4 + $0xc0] sm:$0xff] %v1034
    %1163 = vst [vmem:[%s4 + $0xc8] sm:$0xff] %v1035
    %1164 = vst [vmem:[%s4 + $0xd0] sm:$0xff] %v1036
    %1165 = vst [vmem:[%s4 + $0xd8] sm:$0xff] %v1037
    %1166 = vst [vmem:[%s4 + $0xe0] sm:$0xff] %v1038
    %1167 = vst [vmem:[%s4 + $0xe8] sm:$0xff] %v1039
    %1168 = vst [vmem:[%s4 + $0xf0] sm:$0xff] %v1040
    %1169 = vst [vmem:[%s4 + $0xf8] sm:$0xff] %v1041
    %1170 = vst [vmem:[%s4 + $0x100] sm:$0xff] %v1042
    %1171 = vst [vmem:[%s4 + $0x108] sm:$0xff] %v1043
    %1172 = vst [vmem:[%s4 + $0x110] sm:$0xff] %v1044
    %1173 = vst [vmem:[%s4 + $0x118] sm:$0xff] %v1045
    %1174 = vst [vmem:[%s4 + $0x120] sm:$0xff] %v1046
    %1175 = vst [vmem:[%s4 + $0x128] sm:$0xff] %v1047
    %1176 = vst [vmem:[%s4 + $0x130] sm:$0xff] %v1048
    %1177 = vst [vmem:[%s4 + $0x138] sm:$0xff] %v1049
    %1178 = vst [vmem:[%s4 + $0x140] sm:$0xff] %v1050
    %1179 = vst [vmem:[%s4 + $0x148] sm:$0xff] %v1051
    %1180 = vst [vmem:[%s4 + $0x150] sm:$0xff] %v1052
    %1181 = vst [vmem:[%s4 + $0x158] sm:$0xff] %v1053
    %1182 = vst [vmem:[%s4 + $0x160] sm:$0xff] %v1054
    %1183 = vst [vmem:[%s4 + $0x168] sm:$0xff] %v1055
    %1184 = vst [vmem:[%s4 + $0x170] sm:$0xff] %v1056
    %1185 = vst [vmem:[%s4 + $0x178] sm:$0xff] %v1057
    %1186 = vst [vmem:[%s4 + $0x180] sm:$0xff] %v1058
    %1187 = vst [vmem:[%s4 + $0x188] sm:$0xff] %v1059
    %1188 = vst [vmem:[%s4 + $0x190] sm:$0xff] %v1060
    %1189 = vst [vmem:[%s4 + $0x198] sm:$0xff] %v1061
    %1190 = vst [vmem:[%s4 + $0x1a0] sm:$0xff] %v1062
    %1191 = vst [vmem:[%s4 + $0x1a8] sm:$0xff] %v1063
    %1192 = vst [vmem:[%s4 + $0x1b0] sm:$0xff] %v1064
    %1193 = vst [vmem:[%s4 + $0x1b8] sm:$0xff] %v1065
    %1194 = vst [vmem:[%s4 + $0x1c0] sm:$0xff] %v1066
    %1195 = vst [vmem:[%s4 + $0x1c8] sm:$0xff] %v1067
    %1196 = vst [vmem:[%s4 + $0x1d0] sm:$0xff] %v1068
    %1197 = vst [vmem:[%s4 + $0x1d8] sm:$0xff] %v1069
    %1198 = vst [vmem:[%s4 + $0x1e0] sm:$0xff] %v1070
    %1199 = vst [vmem:[%s4 + $0x1e8] sm:$0xff] %v1071
    %1200 = vst [vmem:[%s4 + $0x1f0] sm:$0xff] %v1072
    %1201 = vst [vmem:[%s4 + $0x1f8] sm:$0xff] %v1073
    %1202 = vst [vmem:[%s4 + $0x200] sm:$0xff] %v1074
    %1203 = vst [vmem:[%s4 + $0x208] sm:$0xff] %v1075
    %1204 = vst [vmem:[%s4 + $0x210] sm:$0xff] %v1076
    %1205 = vst [vmem:[%s4 + $0x218] sm:$0xff] %v1077
    %1206 = vst [vmem:[%s4 + $0x220] sm:$0xff] %v1078
    %1207 = vst [vmem:[%s4 + $0x228] sm:$0xff] %v1079
    %1208 = vst [vmem:[%s4 + $0x230] sm:$0xff] %v1080
    %1209 = vst [vmem:[%s4 + $0x238] sm:$0xff] %v1081
    %1210 = vst [vmem:[%s4 + $0x240] sm:$0xff] %v1082
    %1211 = vst [vmem:[%s4 + $0x248] sm:$0xff] %v1083
    %1212 = vst [vmem:[%s4 + $0x250] sm:$0xff] %v1084
    %1213 = vst [vmem:[%s4 + $0x258] sm:$0xff] %v1085
    %1214 = vst [vmem:[%s4 + $0x260] sm:$0xff] %v1086
    %1215 = vst [vmem:[%s4 + $0x268] sm:$0xff] %v1087
    %1216 = vst [vmem:[%s4 + $0x270] sm:$0xff] %v1088
    %1217 = vst [vmem:[%s4 + $0x278] sm:$0xff] %v1089
    %1218 = vst [vmem:[%s4 + $0x280] sm:$0xff] %v1090
    %1219 = vst [vmem:[%s4 + $0x288] sm:$0xff] %v1091
    %1220 = vst [vmem:[%s4 + $0x290] sm:$0xff] %v1092
    %1221 = vst [vmem:[%s4 + $0x298] sm:$0xff] %v1093
    %1222 = vst [vmem:[%s4 + $0x2a0] sm:$0xff] %v1094
    %1223 = vst [vmem:[%s4 + $0x2a8] sm:$0xff] %v1095
    %1224 = vst [vmem:[%s4 + $0x2b0] sm:$0xff] %v1096
    %1225 = vst [vmem:[%s4 + $0x2b8] sm:$0xff] %v1097
    %1226 = vst [vmem:[%s4 + $0x2c0] sm:$0xff] %v1098
    %1227 = vst [vmem:[%s4 + $0x2c8] sm:$0xff] %v1099
    %1228 = vst [vmem:[%s4 + $0x2d0] sm:$0xff] %v1100
    %1229 = vst [vmem:[%s4 + $0x2d8] sm:$0xff] %v1101
    %1230 = vst [vmem:[%s4 + $0x2e0] sm:$0xff] %v1102
    %1231 = vst [vmem:[%s4 + $0x2e8] sm:$0xff] %v1103
    %1232 = vst [vmem:[%s4 + $0x2f0] sm:$0xff] %v1104
    %1233 = vst [vmem:[%s4 + $0x2f8] sm:$0xff] %v1105
    %1234 = vst [vmem:[%s4 + $0x300] sm:$0xff] %v1106
    %1235 = vst [vmem:[%s4 + $0x308] sm:$0xff] %v1107
    %1236 = vst [vmem:[%s4 + $0x310] sm:$0xff] %v1108
    %1237 = vst [vmem:[%s4 + $0x318] sm:$0xff] %v1109
    %1238 = vst [vmem:[%s4 + $0x320] sm:$0xff] %v1110
    %1239 = vst [vmem:[%s4 + $0x328] sm:$0xff] %v1111
    %1240 = vst [vmem:[%s4 + $0x330] sm:$0xff] %v1112
    %1241 = vst [vmem:[%s4 + $0x338] sm:$0xff] %v1113
    %1242 = vst [vmem:[%s4 + $0x340] sm:$0xff] %v1114
    %1243 = vst [vmem:[%s4 + $0x348] sm:$0xff] %v1115
    %1244 = vst [vmem:[%s4 + $0x350] sm:$0xff] %v1116
    %1245 = vst [vmem:[%s4 + $0x358] sm:$0xff] %v1117
    %1246 = vst [vmem:[%s4 + $0x360] sm:$0xff] %v1118
    %1247 = vst [vmem:[%s4 + $0x368] sm:$0xff] %v1119
    %1248 = vst [vmem:[%s4 + $0x370] sm:$0xff] %v1120
    %1249 = vst [vmem:[%s4 + $0x378] sm:$0xff] %v1121
    %1250 = vst [vmem:[%s4 + $0x380] sm:$0xff] %v1122
    %1251 = vst [vmem:[%s4 + $0x388] sm:$0xff] %v1123
    %1252 = vst [vmem:[%s4 + $0x390] sm:$0xff] %v1124
    %1253 = vst [vmem:[%s4 + $0x398] sm:$0xff] %v1125
    %1254 = vst [vmem:[%s4 + $0x3a0] sm:$0xff] %v1126
    %1255 = vst [vmem:[%s4 + $0x3a8] sm:$0xff] %v1127
    %1256 = vst [vmem:[%s4 + $0x3b0] sm:$0xff] %v1128
    %1257 = vst [vmem:[%s4 + $0x3b8] sm:$0xff] %v1129
    %1258 = vst [vmem:[%s4 + $0x3c0] sm:$0xff] %v1130
    %1259 = vst [vmem:[%s4 + $0x3c8] sm:$0xff] %v1131
    %1260 = vst [vmem:[%s4 + $0x3d0] sm:$0xff] %v1132
    %1261 = vst [vmem:[%s4 + $0x3d8] sm:$0xff] %v1133
    %1262 = vst [vmem:[%s4 + $0x3e0] sm:$0xff] %v1134
    %1263 = vst [vmem:[%s4 + $0x3e8] sm:$0xff] %v1135
    %1264 = vst [vmem:[%s4 + $0x3f0] sm:$0xff] %v1136
    %1265 = vst [vmem:[%s4 + $0x3f8] sm:$0xff] %v1137
    // Predicated region
    $region30: #{dam_embedding_forward.2} parent=1 // pred_check
      _
    $region31: #{dam_embedding_forward.2} parent=1 // pred_check_branch
      %1267 = sbr.rel (0) target = $region33
    $region32: #{dam_embedding_forward.2} parent=1 // pred_region
      _
    $region33: #{dam_embedding_forward.2} parent=1 // pred_fallthru
      _
    // Predicated region
    $region34: #{dam_embedding_forward.2} parent=1 // pred_check
      _
    $region35: #{dam_embedding_forward.2} parent=1 // pred_check_branch
      %1269 = sbr.rel (0) target = $region37
    $region36: #{dam_embedding_forward.2} parent=1 // pred_region
      _
    $region37: #{dam_embedding_forward.2} parent=1 // pred_fallthru
      _
    %1270 = vsyncpa [#allocation3], 1
    %1271 = vsyncpa [#allocation5], 1

</llo_original>
